<compile_context>
chip_gen: v5e
topology: v5e:2x2
jax: 0.10.0
libtpu: 0.0.40
codegen_flags: <defaults>
</compile_context>

<pallas_src>
import functools

import jax
import jax.numpy as jnp
from jax.experimental import pallas as pl
from jax.experimental.pallas import tpu as pltpu


def _make_fused_convblock_kernel(H, W, KH, KW, pad, Cin, C1, C2, LPAD):
    """Conv2d+bias -> Conv2d+bias -> ReLU, fused, one batch element per step."""
    HW = H * W

    def kernel(x_ref, w1_ref, b1_ref, w2_ref, b2_ref, mask_ref, o_ref,
               xe_ref, y1e_ref):
        # x_ref  : (1, Cin, HW)        NCHW input, spatial flattened onto lanes
        # w*_ref : (KH*KW, Cout, Cin)  per-tap weight matrices
        # b*_ref : (Cout, 1)           biases (lane-broadcast)
        # mask_ref: (KW, HW)           column-border validity masks (0/1 f32)
        # o_ref  : (1, C2, HW)
        # xe_ref : (Cin, 2*LPAD+HW)    flat lane-padded conv1 input  (VMEM)
        # y1e_ref: (C1,  2*LPAD+HW)    flat lane-padded conv1 output (VMEM)

        # Zero only the pad strips; interiors are fully overwritten below.
        # (Never gated on program_id -> correct under megacore sharding.)
        xe_ref[:, 0:LPAD] = jnp.zeros((Cin, LPAD), jnp.float32)
        xe_ref[:, LPAD + HW:2 * LPAD + HW] = jnp.zeros((Cin, LPAD), jnp.float32)
        y1e_ref[:, 0:LPAD] = jnp.zeros((C1, LPAD), jnp.float32)
        y1e_ref[:, LPAD + HW:2 * LPAD + HW] = jnp.zeros((C1, LPAD), jnp.float32)

        # Lane-aligned interior write (LPAD and HW are multiples of 128 here).
        xe_ref[:, LPAD:LPAD + HW] = x_ref[0].astype(jnp.float32)

        def conv(src_ref, w_ref):
            acc = None
            for kh in range(KH):
                for kw in range(KW):
                    start = LPAD + (kh - pad) * W + (kw - pad)
                    tap = src_ref[:, start:start + HW]       # pure lane shift
                    if kw != pad:                            # column border
                        tap = tap * mask_ref[kw:kw + 1, :]
                    part = jnp.dot(w_ref[kh * KW + kw], tap,
                                   preferred_element_type=jnp.float32)
                    acc = part if acc is None else acc + part
            return acc

        y1 = conv(xe_ref, w1_ref) + b1_ref[...]              # (C1, HW), f32
        y1e_ref[:, LPAD:LPAD + HW] = y1                      # stays in VMEM
        y2 = conv(y1e_ref, w2_ref) + b2_ref[...]             # (C2, HW), f32
        o_ref[...] = jnp.maximum(y2, 0.0).reshape(1, C2, HW).astype(o_ref.dtype)

    return kernel


@functools.partial(jax.jit, static_argnames=("padding",))
def conv_block_forward(x_nchw, w1_oihw, b1, w2_oihw, b2, *, padding=1):
    """ConvBlock forward: Conv -> Conv -> ReLU. NCHW activations, OIHW weights."""
    N, Cin, H, W = x_nchw.shape
    C1, _, KH, KW = w1_oihw.shape
    C2 = w2_oihw.shape[0]
    assert padding >= 1 and padding == (KH - 1) // 2 == (KW - 1) // 2, (
        "fused kernel assumes 'same' convolutions (output HxW == input HxW)")
    HW = H * W
    pad_flat = padding * W + padding
    LPAD = 128                      # lane-aligned zero strip on each side
    assert pad_flat <= LPAD

    # Free reshapes only — no activation transposes.
    x_flat = x_nchw.reshape(N, Cin, HW)
    # Per-tap (Cout, Cin) weight matrices, indexed by kh*KW + kw (tiny, weights only).
    w1_taps = jnp.transpose(w1_oihw, (2, 3, 0, 1)).reshape(KH * KW, C1, Cin)
    w2_taps = jnp.transpose(w2_oihw, (2, 3, 0, 1)).reshape(KH * KW, C2, C1)
    b1_col = b1.reshape(C1, 1)
    b2_col = b2.reshape(C2, 1)

    # Column-border masks (constant under jit): mask[kw, i*W+j] = (0 <= j+kw-pad < W).
    col = jnp.arange(HW, dtype=jnp.int32) % W
    src_col = col[None, :] + (jnp.arange(KW, dtype=jnp.int32)[:, None] - padding)
    col_mask = ((src_col >= 0) & (src_col < W)).astype(jnp.float32)   # (KW, HW)

    kernel = _make_fused_convblock_kernel(H, W, KH, KW, padding,
                                          Cin, C1, C2, LPAD)

    grid_spec = pltpu.PrefetchScalarGridSpec(
        num_scalar_prefetch=0,
        grid=(N,),
        in_specs=[
            pl.BlockSpec((1, Cin, HW), lambda i: (i, 0, 0)),
            pl.BlockSpec((KH * KW, C1, Cin), lambda i: (0, 0, 0)),
            pl.BlockSpec((C1, 1), lambda i: (0, 0)),
            pl.BlockSpec((KH * KW, C2, C1), lambda i: (0, 0, 0)),
            pl.BlockSpec((C2, 1), lambda i: (0, 0)),
            pl.BlockSpec((KW, HW), lambda i: (0, 0)),
        ],
        out_specs=pl.BlockSpec((1, C2, HW), lambda i: (i, 0, 0)),
        scratch_shapes=[
            pltpu.VMEM((Cin, 2 * LPAD + HW), jnp.float32),
            pltpu.VMEM((C1, 2 * LPAD + HW), jnp.float32),
        ],
    )

    flops = 2 * N * HW * KH * KW * (Cin * C1 + C1 * C2)
    bytes_accessed = 4 * (N * Cin * HW + N * C2 * HW + KW * HW
                          + KH * KW * (Cin * C1 + C1 * C2) + C1 + C2)

    y_flat = pl.pallas_call(
        kernel,
        out_shape=jax.ShapeDtypeStruct((N, C2, HW), x_nchw.dtype),
        grid_spec=grid_spec,
        compiler_params=pltpu.CompilerParams(dimension_semantics=("parallel",)),
        cost_estimate=pl.CostEstimate(flops=flops, transcendentals=0,
                                      bytes_accessed=bytes_accessed),
    )(x_flat, w1_taps, b1_col, w2_taps, b2_col, col_mask)

    return y_flat.reshape(N, C2, H, W)


def _reference_forward(x_nchw, w1_oihw, b1, w2_oihw, b2, *, padding=1):
    """Pure-JAX reference (lax conv) for correctness checking."""
    x = x_nchw
    for w, b, relu in ((w1_oihw, b1, False), (w2_oihw, b2, True)):
        x = jax.lax.conv_general_dilated(
            x, w, window_strides=(1, 1),
            padding=[(padding, padding), (padding, padding)],
            dimension_numbers=("NCHW", "OIHW", "NCHW"),
        ) + b.reshape(1, -1, 1, 1)
        if relu:
            x = jnp.maximum(x, 0.0)
    return x


if __name__ == "__main__":
    N, Cin, H, W = 2, 4, 16, 16
    Cout, K, PAD = 8, 3, 1

    key = jax.random.PRNGKey(0)
    k1, k2, k3, k4, k5 = jax.random.split(key, 5)

    x = jax.random.normal(k1, (N, Cin, H, W), dtype=jnp.float32)          # NCHW
    # Weights in PyTorch OIHW layout (Cout, Cin, KH, KW).
    w1 = jax.random.normal(k2, (Cout, Cin, K, K), dtype=jnp.float32) * 0.1
    b1 = jax.random.normal(k3, (Cout,), dtype=jnp.float32) * 0.1
    w2 = jax.random.normal(k4, (Cout, Cout, K, K), dtype=jnp.float32) * 0.1
    b2 = jax.random.normal(k5, (Cout,), dtype=jnp.float32) * 0.1

    out = conv_block_forward(x, w1, b1, w2, b2, padding=PAD)
    out = jax.block_until_ready(out)

    ref = _reference_forward(x, w1, b1, w2, b2, padding=PAD)
    assert out.shape == (N, Cout, H, W), out.shape
    assert jnp.allclose(out, ref, atol=1e-4, rtol=1e-4), "mismatch vs reference"

    print("KERNEL_OK")
</pallas_src>

<mosaic_0001>
module attributes {stable_mosaic.version = 11 : i64} {
  func.func @kernel(%arg0: i32, %arg1: memref<1x4x256xf32, #tpu.memory_space<vmem>>, %arg2: memref<9x8x4xf32, #tpu.memory_space<vmem>>, %arg3: memref<8x1xf32, #tpu.memory_space<vmem>>, %arg4: memref<9x8x8xf32, #tpu.memory_space<vmem>>, %arg5: memref<8x1xf32, #tpu.memory_space<vmem>>, %arg6: memref<3x256xf32, #tpu.memory_space<vmem>>, %arg7: memref<1x8x256xf32, #tpu.memory_space<vmem>>, %arg8: memref<4x512xf32, #tpu.memory_space<vmem>>, %arg9: memref<8x512xf32, #tpu.memory_space<vmem>>) attributes {dimension_semantics = [#tpu.dimension_semantics<parallel>], iteration_bounds = array<i64: 2>, scalar_prefetch = 0 : i64, scratch_operands = 2 : i64, tpu.core_type = #tpu.core_type<tc>, window_params = [{transform_indices = @transform_0, window_bounds = array<i64: 1, 4, 256>}, {pipeline_mode = #tpu.pipeline_mode<synchronous>, transform_indices = @transform_1, window_bounds = array<i64: 9, 8, 4>}, {pipeline_mode = #tpu.pipeline_mode<synchronous>, transform_indices = @transform_2, window_bounds = array<i64: 8, 1>}, {pipeline_mode = #tpu.pipeline_mode<synchronous>, transform_indices = @transform_3, window_bounds = array<i64: 9, 8, 8>}, {pipeline_mode = #tpu.pipeline_mode<synchronous>, transform_indices = @transform_4, window_bounds = array<i64: 8, 1>}, {pipeline_mode = #tpu.pipeline_mode<synchronous>, transform_indices = @transform_5, window_bounds = array<i64: 3, 256>}, {transform_indices = @transform_6, window_bounds = array<i64: 1, 8, 256>}]} {
    %cst = arith.constant 0.000000e+00 : f32
    %0 = vector.broadcast %cst : f32 to vector<4x128xf32>
    %c0 = arith.constant 0 : index
    %c0_0 = arith.constant 0 : index
    %1 = vector.load %arg8[%c0, %c0_0] : memref<4x512xf32, #tpu.memory_space<vmem>>, vector<4x128xf32>
    tpu.vector_store %arg8[%c0, %c0_0], %0 {strides = array<i32>} : memref<4x512xf32, #tpu.memory_space<vmem>>, vector<4x128xf32>,
    %cst_1 = arith.constant 0.000000e+00 : f32
    %2 = vector.broadcast %cst_1 : f32 to vector<4x128xf32>
    %c0_2 = arith.constant 0 : index
    %c384 = arith.constant 384 : index
    %3 = vector.load %arg8[%c0_2, %c384] : memref<4x512xf32, #tpu.memory_space<vmem>>, vector<4x128xf32>
    tpu.vector_store %arg8[%c0_2, %c384], %2 {strides = array<i32>} : memref<4x512xf32, #tpu.memory_space<vmem>>, vector<4x128xf32>,
    %cst_3 = arith.constant 0.000000e+00 : f32
    %4 = vector.broadcast %cst_3 : f32 to vector<8x128xf32>
    %c0_4 = arith.constant 0 : index
    %c0_5 = arith.constant 0 : index
    %5 = vector.load %arg9[%c0_4, %c0_5] : memref<8x512xf32, #tpu.memory_space<vmem>>, vector<8x128xf32>
    tpu.vector_store %arg9[%c0_4, %c0_5], %4 {strides = array<i32>} : memref<8x512xf32, #tpu.memory_space<vmem>>, vector<8x128xf32>,
    %cst_6 = arith.constant 0.000000e+00 : f32
    %6 = vector.broadcast %cst_6 : f32 to vector<8x128xf32>
    %c0_7 = arith.constant 0 : index
    %c384_8 = arith.constant 384 : index
    %7 = vector.load %arg9[%c0_7, %c384_8] : memref<8x512xf32, #tpu.memory_space<vmem>>, vector<8x128xf32>
    tpu.vector_store %arg9[%c0_7, %c384_8], %6 {strides = array<i32>} : memref<8x512xf32, #tpu.memory_space<vmem>>, vector<8x128xf32>,
    %c0_9 = arith.constant 0 : index
    %c0_10 = arith.constant 0 : index
    %c0_11 = arith.constant 0 : index
    %8 = vector.load %arg1[%c0_9, %c0_10, %c0_11] : memref<1x4x256xf32, #tpu.memory_space<vmem>>, vector<1x4x256xf32>
    %9 = vector.shape_cast %8 : vector<1x4x256xf32> to vector<4x256xf32>
    %c0_12 = arith.constant 0 : index
    %c128 = arith.constant 128 : index
    %10 = vector.load %arg8[%c0_12, %c128] : memref<4x512xf32, #tpu.memory_space<vmem>>, vector<4x256xf32>
    tpu.vector_store %arg8[%c0_12, %c128], %9 {strides = array<i32>} : memref<4x512xf32, #tpu.memory_space<vmem>>, vector<4x256xf32>,
    %c0_13 = arith.constant 0 : index
    %c111 = arith.constant 111 : index
    %11 = vector.load %arg8[%c0_13, %c111] : memref<4x512xf32, #tpu.memory_space<vmem>>, vector<4x256xf32>
    %c0_14 = arith.constant 0 : index
    %c0_15 = arith.constant 0 : index
    %12 = vector.load %arg6[%c0_14, %c0_15] : memref<3x256xf32, #tpu.memory_space<vmem>>, vector<1x256xf32>
    %13 = vector.broadcast %12 : vector<1x256xf32> to vector<4x256xf32>
    %14 = arith.mulf %11, %13 : vector<4x256xf32>
    %c0_16 = arith.constant 0 : index
    %c0_17 = arith.constant 0 : index
    %c0_18 = arith.constant 0 : index
    %15 = vector.load %arg2[%c0_16, %c0_17, %c0_18] : memref<9x8x4xf32, #tpu.memory_space<vmem>>, vector<1x8x4xf32>
    %16 = vector.shape_cast %15 : vector<1x8x4xf32> to vector<8x4xf32>
    %cst_19 = arith.constant dense<0.000000e+00> : vector<8x256xf32>
    %17 = tpu.matmul %16, %14, %cst_19 {dimension_numbers = #tpu.dot_dimension_numbers<[1], [0], [0], [1], [0, 0, 1, 1], [], []>} : vector<8x4xf32>, vector<4x256xf32>, vector<8x256xf32> -> vector<8x256xf32>
    %c0_20 = arith.constant 0 : index
    %c112 = arith.constant 112 : index
    %18 = vector.load %arg8[%c0_20, %c112] : memref<4x512xf32, #tpu.memory_space<vmem>>, vector<4x256xf32>
    %c1 = arith.constant 1 : index
    %c0_21 = arith.constant 0 : index
    %c0_22 = arith.constant 0 : index
    %19 = vector.load %arg2[%c1, %c0_21, %c0_22] : memref<9x8x4xf32, #tpu.memory_space<vmem>>, vector<1x8x4xf32>
    %20 = vector.shape_cast %19 : vector<1x8x4xf32> to vector<8x4xf32>
    %cst_23 = arith.constant dense<0.000000e+00> : vector<8x256xf32>
    %21 = tpu.matmul %20, %18, %cst_23 {dimension_numbers = #tpu.dot_dimension_numbers<[1], [0], [0], [1], [0, 0, 1, 1], [], []>} : vector<8x4xf32>, vector<4x256xf32>, vector<8x256xf32> -> vector<8x256xf32>
    %22 = arith.addf %17, %21 : vector<8x256xf32>
    %c0_24 = arith.constant 0 : index
    %c113 = arith.constant 113 : index
    %23 = vector.load %arg8[%c0_24, %c113] : memref<4x512xf32, #tpu.memory_space<vmem>>, vector<4x256xf32>
    %c2 = arith.constant 2 : index
    %c0_25 = arith.constant 0 : index
    %24 = vector.load %arg6[%c2, %c0_25] : memref<3x256xf32, #tpu.memory_space<vmem>>, vector<1x256xf32>
    %25 = vector.broadcast %24 : vector<1x256xf32> to vector<4x256xf32>
    %26 = arith.mulf %23, %25 : vector<4x256xf32>
    %c2_26 = arith.constant 2 : index
    %c0_27 = arith.constant 0 : index
    %c0_28 = arith.constant 0 : index
    %27 = vector.load %arg2[%c2_26, %c0_27, %c0_28] : memref<9x8x4xf32, #tpu.memory_space<vmem>>, vector<1x8x4xf32>
    %28 = vector.shape_cast %27 : vector<1x8x4xf32> to vector<8x4xf32>
    %cst_29 = arith.constant dense<0.000000e+00> : vector<8x256xf32>
    %29 = tpu.matmul %28, %26, %cst_29 {dimension_numbers = #tpu.dot_dimension_numbers<[1], [0], [0], [1], [0, 0, 1, 1], [], []>} : vector<8x4xf32>, vector<4x256xf32>, vector<8x256xf32> -> vector<8x256xf32>
    %30 = arith.addf %22, %29 : vector<8x256xf32>
    %c0_30 = arith.constant 0 : index
    %c127 = arith.constant 127 : index
    %31 = vector.load %arg8[%c0_30, %c127] : memref<4x512xf32, #tpu.memory_space<vmem>>, vector<4x256xf32>
    %c0_31 = arith.constant 0 : index
    %c0_32 = arith.constant 0 : index
    %32 = vector.load %arg6[%c0_31, %c0_32] : memref<3x256xf32, #tpu.memory_space<vmem>>, vector<1x256xf32>
    %33 = vector.broadcast %32 : vector<1x256xf32> to vector<4x256xf32>
    %34 = arith.mulf %31, %33 : vector<4x256xf32>
    %c3 = arith.constant 3 : index
    %c0_33 = arith.constant 0 : index
    %c0_34 = arith.constant 0 : index
    %35 = vector.load %arg2[%c3, %c0_33, %c0_34] : memref<9x8x4xf32, #tpu.memory_space<vmem>>, vector<1x8x4xf32>
    %36 = vector.shape_cast %35 : vector<1x8x4xf32> to vector<8x4xf32>
    %cst_35 = arith.constant dense<0.000000e+00> : vector<8x256xf32>
    %37 = tpu.matmul %36, %34, %cst_35 {dimension_numbers = #tpu.dot_dimension_numbers<[1], [0], [0], [1], [0, 0, 1, 1], [], []>} : vector<8x4xf32>, vector<4x256xf32>, vector<8x256xf32> -> vector<8x256xf32>
    %38 = arith.addf %30, %37 : vector<8x256xf32>
    %c0_36 = arith.constant 0 : index
    %c128_37 = arith.constant 128 : index
    %39 = vector.load %arg8[%c0_36, %c128_37] : memref<4x512xf32, #tpu.memory_space<vmem>>, vector<4x256xf32>
    %c4 = arith.constant 4 : index
    %c0_38 = arith.constant 0 : index
    %c0_39 = arith.constant 0 : index
    %40 = vector.load %arg2[%c4, %c0_38, %c0_39] : memref<9x8x4xf32, #tpu.memory_space<vmem>>, vector<1x8x4xf32>
    %41 = vector.shape_cast %40 : vector<1x8x4xf32> to vector<8x4xf32>
    %cst_40 = arith.constant dense<0.000000e+00> : vector<8x256xf32>
    %42 = tpu.matmul %41, %39, %cst_40 {dimension_numbers = #tpu.dot_dimension_numbers<[1], [0], [0], [1], [0, 0, 1, 1], [], []>} : vector<8x4xf32>, vector<4x256xf32>, vector<8x256xf32> -> vector<8x256xf32>
    %43 = arith.addf %38, %42 : vector<8x256xf32>
    %c0_41 = arith.constant 0 : index
    %c129 = arith.constant 129 : index
    %44 = vector.load %arg8[%c0_41, %c129] : memref<4x512xf32, #tpu.memory_space<vmem>>, vector<4x256xf32>
    %c2_42 = arith.constant 2 : index
    %c0_43 = arith.constant 0 : index
    %45 = vector.load %arg6[%c2_42, %c0_43] : memref<3x256xf32, #tpu.memory_space<vmem>>, vector<1x256xf32>
    %46 = vector.broadcast %45 : vector<1x256xf32> to vector<4x256xf32>
    %47 = arith.mulf %44, %46 : vector<4x256xf32>
    %c5 = arith.constant 5 : index
    %c0_44 = arith.constant 0 : index
    %c0_45 = arith.constant 0 : index
    %48 = vector.load %arg2[%c5, %c0_44, %c0_45] : memref<9x8x4xf32, #tpu.memory_space<vmem>>, vector<1x8x4xf32>
    %49 = vector.shape_cast %48 : vector<1x8x4xf32> to vector<8x4xf32>
    %cst_46 = arith.constant dense<0.000000e+00> : vector<8x256xf32>
    %50 = tpu.matmul %49, %47, %cst_46 {dimension_numbers = #tpu.dot_dimension_numbers<[1], [0], [0], [1], [0, 0, 1, 1], [], []>} : vector<8x4xf32>, vector<4x256xf32>, vector<8x256xf32> -> vector<8x256xf32>
    %51 = arith.addf %43, %50 : vector<8x256xf32>
    %c0_47 = arith.constant 0 : index
    %c143 = arith.constant 143 : index
    %52 = vector.load %arg8[%c0_47, %c143] : memref<4x512xf32, #tpu.memory_space<vmem>>, vector<4x256xf32>
    %c0_48 = arith.constant 0 : index
    %c0_49 = arith.constant 0 : index
    %53 = vector.load %arg6[%c0_48, %c0_49] : memref<3x256xf32, #tpu.memory_space<vmem>>, vector<1x256xf32>
    %54 = vector.broadcast %53 : vector<1x256xf32> to vector<4x256xf32>
    %55 = arith.mulf %52, %54 : vector<4x256xf32>
    %c6 = arith.constant 6 : index
    %c0_50 = arith.constant 0 : index
    %c0_51 = arith.constant 0 : index
    %56 = vector.load %arg2[%c6, %c0_50, %c0_51] : memref<9x8x4xf32, #tpu.memory_space<vmem>>, vector<1x8x4xf32>
    %57 = vector.shape_cast %56 : vector<1x8x4xf32> to vector<8x4xf32>
    %cst_52 = arith.constant dense<0.000000e+00> : vector<8x256xf32>
    %58 = tpu.matmul %57, %55, %cst_52 {dimension_numbers = #tpu.dot_dimension_numbers<[1], [0], [0], [1], [0, 0, 1, 1], [], []>} : vector<8x4xf32>, vector<4x256xf32>, vector<8x256xf32> -> vector<8x256xf32>
    %59 = arith.addf %51, %58 : vector<8x256xf32>
    %c0_53 = arith.constant 0 : index
    %c144 = arith.constant 144 : index
    %60 = vector.load %arg8[%c0_53, %c144] : memref<4x512xf32, #tpu.memory_space<vmem>>, vector<4x256xf32>
    %c7 = arith.constant 7 : index
    %c0_54 = arith.constant 0 : index
    %c0_55 = arith.constant 0 : index
    %61 = vector.load %arg2[%c7, %c0_54, %c0_55] : memref<9x8x4xf32, #tpu.memory_space<vmem>>, vector<1x8x4xf32>
    %62 = vector.shape_cast %61 : vector<1x8x4xf32> to vector<8x4xf32>
    %cst_56 = arith.constant dense<0.000000e+00> : vector<8x256xf32>
    %63 = tpu.matmul %62, %60, %cst_56 {dimension_numbers = #tpu.dot_dimension_numbers<[1], [0], [0], [1], [0, 0, 1, 1], [], []>} : vector<8x4xf32>, vector<4x256xf32>, vector<8x256xf32> -> vector<8x256xf32>
    %64 = arith.addf %59, %63 : vector<8x256xf32>
    %c0_57 = arith.constant 0 : index
    %c145 = arith.constant 145 : index
    %65 = vector.load %arg8[%c0_57, %c145] : memref<4x512xf32, #tpu.memory_space<vmem>>, vector<4x256xf32>
    %c2_58 = arith.constant 2 : index
    %c0_59 = arith.constant 0 : index
    %66 = vector.load %arg6[%c2_58, %c0_59] : memref<3x256xf32, #tpu.memory_space<vmem>>, vector<1x256xf32>
    %67 = vector.broadcast %66 : vector<1x256xf32> to vector<4x256xf32>
    %68 = arith.mulf %65, %67 : vector<4x256xf32>
    %c8 = arith.constant 8 : index
    %c0_60 = arith.constant 0 : index
    %c0_61 = arith.constant 0 : index
    %69 = vector.load %arg2[%c8, %c0_60, %c0_61] : memref<9x8x4xf32, #tpu.memory_space<vmem>>, vector<1x8x4xf32>
    %70 = vector.shape_cast %69 : vector<1x8x4xf32> to vector<8x4xf32>
    %cst_62 = arith.constant dense<0.000000e+00> : vector<8x256xf32>
    %71 = tpu.matmul %70, %68, %cst_62 {dimension_numbers = #tpu.dot_dimension_numbers<[1], [0], [0], [1], [0, 0, 1, 1], [], []>} : vector<8x4xf32>, vector<4x256xf32>, vector<8x256xf32> -> vector<8x256xf32>
    %72 = arith.addf %64, %71 : vector<8x256xf32>
    %c0_63 = arith.constant 0 : index
    %c0_64 = arith.constant 0 : index
    %73 = vector.load %arg3[%c0_63, %c0_64] : memref<8x1xf32, #tpu.memory_space<vmem>>, vector<8x1xf32>
    %74 = vector.broadcast %73 : vector<8x1xf32> to vector<8x256xf32>
    %75 = arith.addf %72, %74 : vector<8x256xf32>
    %c0_65 = arith.constant 0 : index
    %c128_66 = arith.constant 128 : index
    %76 = vector.load %arg9[%c0_65, %c128_66] : memref<8x512xf32, #tpu.memory_space<vmem>>, vector<8x256xf32>
    tpu.vector_store %arg9[%c0_65, %c128_66], %75 {strides = array<i32>} : memref<8x512xf32, #tpu.memory_space<vmem>>, vector<8x256xf32>,
    %c0_67 = arith.constant 0 : index
    %c111_68 = arith.constant 111 : index
    %77 = vector.load %arg9[%c0_67, %c111_68] : memref<8x512xf32, #tpu.memory_space<vmem>>, vector<8x256xf32>
    %c0_69 = arith.constant 0 : index
    %c0_70 = arith.constant 0 : index
    %78 = vector.load %arg6[%c0_69, %c0_70] : memref<3x256xf32, #tpu.memory_space<vmem>>, vector<1x256xf32>
    %79 = vector.broadcast %78 : vector<1x256xf32> to vector<8x256xf32>
    %80 = arith.mulf %77, %79 : vector<8x256xf32>
    %c0_71 = arith.constant 0 : index
    %c0_72 = arith.constant 0 : index
    %c0_73 = arith.constant 0 : index
    %81 = vector.load %arg4[%c0_71, %c0_72, %c0_73] : memref<9x8x8xf32, #tpu.memory_space<vmem>>, vector<1x8x8xf32>
    %82 = vector.shape_cast %81 : vector<1x8x8xf32> to vector<8x8xf32>
    %cst_74 = arith.constant dense<0.000000e+00> : vector<8x256xf32>
    %83 = tpu.matmul %82, %80, %cst_74 {dimension_numbers = #tpu.dot_dimension_numbers<[1], [0], [0], [1], [0, 0, 1, 1], [], []>} : vector<8x8xf32>, vector<8x256xf32>, vector<8x256xf32> -> vector<8x256xf32>
    %c0_75 = arith.constant 0 : index
    %c112_76 = arith.constant 112 : index
    %84 = vector.load %arg9[%c0_75, %c112_76] : memref<8x512xf32, #tpu.memory_space<vmem>>, vector<8x256xf32>
    %c1_77 = arith.constant 1 : index
    %c0_78 = arith.constant 0 : index
    %c0_79 = arith.constant 0 : index
    %85 = vector.load %arg4[%c1_77, %c0_78, %c0_79] : memref<9x8x8xf32, #tpu.memory_space<vmem>>, vector<1x8x8xf32>
    %86 = vector.shape_cast %85 : vector<1x8x8xf32> to vector<8x8xf32>
    %cst_80 = arith.constant dense<0.000000e+00> : vector<8x256xf32>
    %87 = tpu.matmul %86, %84, %cst_80 {dimension_numbers = #tpu.dot_dimension_numbers<[1], [0], [0], [1], [0, 0, 1, 1], [], []>} : vector<8x8xf32>, vector<8x256xf32>, vector<8x256xf32> -> vector<8x256xf32>
    %88 = arith.addf %83, %87 : vector<8x256xf32>
    %c0_81 = arith.constant 0 : index
    %c113_82 = arith.constant 113 : index
    %89 = vector.load %arg9[%c0_81, %c113_82] : memref<8x512xf32, #tpu.memory_space<vmem>>, vector<8x256xf32>
    %c2_83 = arith.constant 2 : index
    %c0_84 = arith.constant 0 : index
    %90 = vector.load %arg6[%c2_83, %c0_84] : memref<3x256xf32, #tpu.memory_space<vmem>>, vector<1x256xf32>
    %91 = vector.broadcast %90 : vector<1x256xf32> to vector<8x256xf32>
    %92 = arith.mulf %89, %91 : vector<8x256xf32>
    %c2_85 = arith.constant 2 : index
    %c0_86 = arith.constant 0 : index
    %c0_87 = arith.constant 0 : index
    %93 = vector.load %arg4[%c2_85, %c0_86, %c0_87] : memref<9x8x8xf32, #tpu.memory_space<vmem>>, vector<1x8x8xf32>
    %94 = vector.shape_cast %93 : vector<1x8x8xf32> to vector<8x8xf32>
    %cst_88 = arith.constant dense<0.000000e+00> : vector<8x256xf32>
    %95 = tpu.matmul %94, %92, %cst_88 {dimension_numbers = #tpu.dot_dimension_numbers<[1], [0], [0], [1], [0, 0, 1, 1], [], []>} : vector<8x8xf32>, vector<8x256xf32>, vector<8x256xf32> -> vector<8x256xf32>
    %96 = arith.addf %88, %95 : vector<8x256xf32>
    %c0_89 = arith.constant 0 : index
    %c127_90 = arith.constant 127 : index
    %97 = vector.load %arg9[%c0_89, %c127_90] : memref<8x512xf32, #tpu.memory_space<vmem>>, vector<8x256xf32>
    %c0_91 = arith.constant 0 : index
    %c0_92 = arith.constant 0 : index
    %98 = vector.load %arg6[%c0_91, %c0_92] : memref<3x256xf32, #tpu.memory_space<vmem>>, vector<1x256xf32>
    %99 = vector.broadcast %98 : vector<1x256xf32> to vector<8x256xf32>
    %100 = arith.mulf %97, %99 : vector<8x256xf32>
    %c3_93 = arith.constant 3 : index
    %c0_94 = arith.constant 0 : index
    %c0_95 = arith.constant 0 : index
    %101 = vector.load %arg4[%c3_93, %c0_94, %c0_95] : memref<9x8x8xf32, #tpu.memory_space<vmem>>, vector<1x8x8xf32>
    %102 = vector.shape_cast %101 : vector<1x8x8xf32> to vector<8x8xf32>
    %cst_96 = arith.constant dense<0.000000e+00> : vector<8x256xf32>
    %103 = tpu.matmul %102, %100, %cst_96 {dimension_numbers = #tpu.dot_dimension_numbers<[1], [0], [0], [1], [0, 0, 1, 1], [], []>} : vector<8x8xf32>, vector<8x256xf32>, vector<8x256xf32> -> vector<8x256xf32>
    %104 = arith.addf %96, %103 : vector<8x256xf32>
    %c0_97 = arith.constant 0 : index
    %c128_98 = arith.constant 128 : index
    %105 = vector.load %arg9[%c0_97, %c128_98] : memref<8x512xf32, #tpu.memory_space<vmem>>, vector<8x256xf32>
    %c4_99 = arith.constant 4 : index
    %c0_100 = arith.constant 0 : index
    %c0_101 = arith.constant 0 : index
    %106 = vector.load %arg4[%c4_99, %c0_100, %c0_101] : memref<9x8x8xf32, #tpu.memory_space<vmem>>, vector<1x8x8xf32>
    %107 = vector.shape_cast %106 : vector<1x8x8xf32> to vector<8x8xf32>
    %cst_102 = arith.constant dense<0.000000e+00> : vector<8x256xf32>
    %108 = tpu.matmul %107, %105, %cst_102 {dimension_numbers = #tpu.dot_dimension_numbers<[1], [0], [0], [1], [0, 0, 1, 1], [], []>} : vector<8x8xf32>, vector<8x256xf32>, vector<8x256xf32> -> vector<8x256xf32>
    %109 = arith.addf %104, %108 : vector<8x256xf32>
    %c0_103 = arith.constant 0 : index
    %c129_104 = arith.constant 129 : index
    %110 = vector.load %arg9[%c0_103, %c129_104] : memref<8x512xf32, #tpu.memory_space<vmem>>, vector<8x256xf32>
    %c2_105 = arith.constant 2 : index
    %c0_106 = arith.constant 0 : index
    %111 = vector.load %arg6[%c2_105, %c0_106] : memref<3x256xf32, #tpu.memory_space<vmem>>, vector<1x256xf32>
    %112 = vector.broadcast %111 : vector<1x256xf32> to vector<8x256xf32>
    %113 = arith.mulf %110, %112 : vector<8x256xf32>
    %c5_107 = arith.constant 5 : index
    %c0_108 = arith.constant 0 : index
    %c0_109 = arith.constant 0 : index
    %114 = vector.load %arg4[%c5_107, %c0_108, %c0_109] : memref<9x8x8xf32, #tpu.memory_space<vmem>>, vector<1x8x8xf32>
    %115 = vector.shape_cast %114 : vector<1x8x8xf32> to vector<8x8xf32>
    %cst_110 = arith.constant dense<0.000000e+00> : vector<8x256xf32>
    %116 = tpu.matmul %115, %113, %cst_110 {dimension_numbers = #tpu.dot_dimension_numbers<[1], [0], [0], [1], [0, 0, 1, 1], [], []>} : vector<8x8xf32>, vector<8x256xf32>, vector<8x256xf32> -> vector<8x256xf32>
    %117 = arith.addf %109, %116 : vector<8x256xf32>
    %c0_111 = arith.constant 0 : index
    %c143_112 = arith.constant 143 : index
    %118 = vector.load %arg9[%c0_111, %c143_112] : memref<8x512xf32, #tpu.memory_space<vmem>>, vector<8x256xf32>
    %c0_113 = arith.constant 0 : index
    %c0_114 = arith.constant 0 : index
    %119 = vector.load %arg6[%c0_113, %c0_114] : memref<3x256xf32, #tpu.memory_space<vmem>>, vector<1x256xf32>
    %120 = vector.broadcast %119 : vector<1x256xf32> to vector<8x256xf32>
    %121 = arith.mulf %118, %120 : vector<8x256xf32>
    %c6_115 = arith.constant 6 : index
    %c0_116 = arith.constant 0 : index
    %c0_117 = arith.constant 0 : index
    %122 = vector.load %arg4[%c6_115, %c0_116, %c0_117] : memref<9x8x8xf32, #tpu.memory_space<vmem>>, vector<1x8x8xf32>
    %123 = vector.shape_cast %122 : vector<1x8x8xf32> to vector<8x8xf32>
    %cst_118 = arith.constant dense<0.000000e+00> : vector<8x256xf32>
    %124 = tpu.matmul %123, %121, %cst_118 {dimension_numbers = #tpu.dot_dimension_numbers<[1], [0], [0], [1], [0, 0, 1, 1], [], []>} : vector<8x8xf32>, vector<8x256xf32>, vector<8x256xf32> -> vector<8x256xf32>
    %125 = arith.addf %117, %124 : vector<8x256xf32>
    %c0_119 = arith.constant 0 : index
    %c144_120 = arith.constant 144 : index
    %126 = vector.load %arg9[%c0_119, %c144_120] : memref<8x512xf32, #tpu.memory_space<vmem>>, vector<8x256xf32>
    %c7_121 = arith.constant 7 : index
    %c0_122 = arith.constant 0 : index
    %c0_123 = arith.constant 0 : index
    %127 = vector.load %arg4[%c7_121, %c0_122, %c0_123] : memref<9x8x8xf32, #tpu.memory_space<vmem>>, vector<1x8x8xf32>
    %128 = vector.shape_cast %127 : vector<1x8x8xf32> to vector<8x8xf32>
    %cst_124 = arith.constant dense<0.000000e+00> : vector<8x256xf32>
    %129 = tpu.matmul %128, %126, %cst_124 {dimension_numbers = #tpu.dot_dimension_numbers<[1], [0], [0], [1], [0, 0, 1, 1], [], []>} : vector<8x8xf32>, vector<8x256xf32>, vector<8x256xf32> -> vector<8x256xf32>
    %130 = arith.addf %125, %129 : vector<8x256xf32>
    %c0_125 = arith.constant 0 : index
    %c145_126 = arith.constant 145 : index
    %131 = vector.load %arg9[%c0_125, %c145_126] : memref<8x512xf32, #tpu.memory_space<vmem>>, vector<8x256xf32>
    %c2_127 = arith.constant 2 : index
    %c0_128 = arith.constant 0 : index
    %132 = vector.load %arg6[%c2_127, %c0_128] : memref<3x256xf32, #tpu.memory_space<vmem>>, vector<1x256xf32>
    %133 = vector.broadcast %132 : vector<1x256xf32> to vector<8x256xf32>
    %134 = arith.mulf %131, %133 : vector<8x256xf32>
    %c8_129 = arith.constant 8 : index
    %c0_130 = arith.constant 0 : index
    %c0_131 = arith.constant 0 : index
    %135 = vector.load %arg4[%c8_129, %c0_130, %c0_131] : memref<9x8x8xf32, #tpu.memory_space<vmem>>, vector<1x8x8xf32>
    %136 = vector.shape_cast %135 : vector<1x8x8xf32> to vector<8x8xf32>
    %cst_132 = arith.constant dense<0.000000e+00> : vector<8x256xf32>
    %137 = tpu.matmul %136, %134, %cst_132 {dimension_numbers = #tpu.dot_dimension_numbers<[1], [0], [0], [1], [0, 0, 1, 1], [], []>} : vector<8x8xf32>, vector<8x256xf32>, vector<8x256xf32> -> vector<8x256xf32>
    %138 = arith.addf %130, %137 : vector<8x256xf32>
    %c0_133 = arith.constant 0 : index
    %c0_134 = arith.constant 0 : index
    %139 = vector.load %arg5[%c0_133, %c0_134] : memref<8x1xf32, #tpu.memory_space<vmem>>, vector<8x1xf32>
    %140 = vector.broadcast %139 : vector<8x1xf32> to vector<8x256xf32>
    %141 = arith.addf %138, %140 : vector<8x256xf32>
    %cst_135 = arith.constant 0.000000e+00 : f32
    %142 = vector.broadcast %cst_135 : f32 to vector<8x256xf32>
    %143 = arith.maximumf %141, %142 : vector<8x256xf32>
    %144 = vector.shape_cast %143 : vector<8x256xf32> to vector<1x8x256xf32>
    %c0_136 = arith.constant 0 : index
    %c0_137 = arith.constant 0 : index
    %c0_138 = arith.constant 0 : index
    %145 = vector.load %arg7[%c0_136, %c0_137, %c0_138] : memref<1x8x256xf32, #tpu.memory_space<vmem>>, vector<1x8x256xf32>
    tpu.vector_store %arg7[%c0_136, %c0_137, %c0_138], %144 {strides = array<i32>} : memref<1x8x256xf32, #tpu.memory_space<vmem>>, vector<1x8x256xf32>,
    return
  }
  func.func @transform_0(%arg0: i32) -> (i32, i32, i32) {
    %c0_i32 = arith.constant 0 : i32
    %c0_i32_0 = arith.constant 0 : i32
    %c0_i32_1 = arith.constant 0 : i32
    return %arg0, %c0_i32, %c0_i32_0 : i32, i32, i32
  }
  func.func @transform_1(%arg0: i32) -> (i32, i32, i32) {
    %c0_i32 = arith.constant 0 : i32
    %c0_i32_0 = arith.constant 0 : i32
    %c0_i32_1 = arith.constant 0 : i32
    %c0_i32_2 = arith.constant 0 : i32
    return %c0_i32, %c0_i32_0, %c0_i32_1 : i32, i32, i32
  }
  func.func @transform_2(%arg0: i32) -> (i32, i32) {
    %c0_i32 = arith.constant 0 : i32
    %c0_i32_0 = arith.constant 0 : i32
    %c0_i32_1 = arith.constant 0 : i32
    return %c0_i32, %c0_i32_0 : i32, i32
  }
  func.func @transform_3(%arg0: i32) -> (i32, i32, i32) {
    %c0_i32 = arith.constant 0 : i32
    %c0_i32_0 = arith.constant 0 : i32
    %c0_i32_1 = arith.constant 0 : i32
    %c0_i32_2 = arith.constant 0 : i32
    return %c0_i32, %c0_i32_0, %c0_i32_1 : i32, i32, i32
  }
  func.func @transform_4(%arg0: i32) -> (i32, i32) {
    %c0_i32 = arith.constant 0 : i32
    %c0_i32_0 = arith.constant 0 : i32
    %c0_i32_1 = arith.constant 0 : i32
    return %c0_i32, %c0_i32_0 : i32, i32
  }
  func.func @transform_5(%arg0: i32) -> (i32, i32) {
    %c0_i32 = arith.constant 0 : i32
    %c0_i32_0 = arith.constant 0 : i32
    %c0_i32_1 = arith.constant 0 : i32
    return %c0_i32, %c0_i32_0 : i32, i32
  }
  func.func @transform_6(%arg0: i32) -> (i32, i32, i32) {
    %c0_i32 = arith.constant 0 : i32
    %c0_i32_0 = arith.constant 0 : i32
    %c0_i32_1 = arith.constant 0 : i32
    return %arg0, %c0_i32, %c0_i32_0 : i32, i32, i32
  }
}

</mosaic_0001>

<llo_original>
// kernel: conv_block_forward.1
$region0: #{conv_block_forward.1}
  #allocation0 [shape = 'u32[]', space=smem, size = 0x4, offset = 0x4, fixed_abs, tag = 'smem constant byte address 0x4 - core index']
  #allocation1 [shape = 'u32[72,128]{1,0:T(1,128)}', space=vmem, size = 0x9000, scoped, tag = 'internal scratch']
  #allocation2 [shape = 'f32[4,512]{1,0:T(4,128)}', space=vmem, size = 0x2000, scoped, tag = 'scratch operand']
  #allocation3 [shape = 'f32[8,512]{1,0:T(8,128)}', space=vmem, size = 0x4000, scoped, tag = 'scratch operand']
  %s0 = inlined_call_operand.vmem [shape: f32[2,4,256], index: 0, kind: input, shape index: {}]
  %s1 = inlined_call_operand.vmem [shape: f32[9,8,4], index: 1, kind: input, shape index: {}]
  %s2 = inlined_call_operand.vmem [shape: f32[8,1], index: 2, kind: input, shape index: {}]
  %s3 = inlined_call_operand.vmem [shape: f32[9,8,8], index: 3, kind: input, shape index: {}]
  %s4 = inlined_call_operand.vmem [shape: f32[8,1], index: 4, kind: input, shape index: {}]
  %s5 = inlined_call_operand.vmem [shape: f32[3,256], index: 5, kind: input, shape index: {}]
  %s6 = inlined_call_operand.vmem [shape: f32[2,8,256], index: 6, kind: output, shape index: {}]
  %s7 = sld [smem:[#allocation0]]
  $region57: #{conv_block_forward.1} parent=0
    _
  %s9 = ssub.s32 1, %s7
  %s10 = scalar_select 0, %s9, %s7
  loop: start=0, step=1, limit=4
  $region2: #{conv_block_forward.1} parent=0 // loop_pre_header
    _
  $region3: #{conv_block_forward.1} parent=0 // loop_header
    %s12 = sphi 0, %s16
    %p13 = scmp.ge.s32.totalorder %s12, 4
    %s22 = sphi 0, %s24
    %s25 = sphi 0, %s22
    %s26 = sphi 0, %s25
    %s42 = sphi 0, %s26
    %s46 = sphi 0, %s46
    %s48 = sphi 0, %s46
    %s49 = sphi 0, %s48
    %s63 = sphi 0, %s49
    %s67 = sphi 0, %s67
    %s69 = sphi 0, %s67
    %s70 = sphi 0, %s69
    %s84 = sphi 0, %s70
    %s88 = sphi 0, %s88
    %s90 = sphi 0, %s88
    %s91 = sphi 0, %s90
    %s105 = sphi 0, %s91
    %s109 = sphi 0, %s109
    %s111 = sphi 0, %s109
    %s112 = sphi 0, %s111
    %s126 = sphi 0, %s112
    %s130 = sphi 0, %s130
    %s132 = sphi 0, %s130
    %s133 = sphi 0, %s132
    %s147 = sphi 0, %s133
    %s153 = sphi 0, %s155
    %s156 = sphi 0, %s153
    %s157 = sphi 0, %s156
    %s173 = sphi 0, %s157
  $region4: #{conv_block_forward.1} parent=0 // loop_header_branch
    %15 = sbr.rel (%p13) target = $region8
  $region5: #{conv_block_forward.1} parent=0 // loop_body
    %s17 = ssub.s32 %s12, 1
    %s18 = ssub.s32 %s12, 2
    %s19 = sadd.s32 %s12, 1
    %s20 = ssub.s32 %s12, %s19
    %p21 = scmp.eq.s32.totalorder %s20, 0
    %s23 = sadd.s32 %s22, 1
    %s24 = scalar_select %p21, %s22, %s23
    %p27 = pneg %p21
    %p28 = scmp.eq.s32.totalorder %s12, 1
    %p29 = por %p27, %p28
    %p30 = scmp.ne.s32.totalorder %s22, %s25
    %p31 = scmp.eq.s32.totalorder %s12, 0
    %p32 = por %p30, %p31
    %p33 = scmp.ne.s32.totalorder %s22, %s25
    %p34 = scmp.eq.s32.totalorder %s17, 1
    %p35 = por %p33, %p34
    %p36 = scmp.ne.s32.totalorder %s25, %s26
    %p37 = scmp.eq.s32.totalorder %s17, 0
    %p38 = por %p36, %p37
    %p39 = scmp.ne.s32.totalorder %s25, %s26
    %p40 = scmp.eq.s32.totalorder %s18, 1
    %p41 = por %p39, %p40
    %p43 = scmp.ne.s32.totalorder %s26, %s42
    %p44 = scmp.eq.s32.totalorder %s18, 0
    %p45 = por %p43, %p44
    %s47 = sadd.s32 %s46, 1
    %p50 = scmp.eq.s32.totalorder %s12, 1
    %p51 = scmp.ne.s32.totalorder %s46, %s48
    %p52 = scmp.eq.s32.totalorder %s12, 0
    %p53 = por %p51, %p52
    %p54 = scmp.ne.s32.totalorder %s46, %s48
    %p55 = scmp.eq.s32.totalorder %s17, 1
    %p56 = por %p54, %p55
    %p57 = scmp.ne.s32.totalorder %s48, %s49
    %p58 = scmp.eq.s32.totalorder %s17, 0
    %p59 = por %p57, %p58
    %p60 = scmp.ne.s32.totalorder %s48, %s49
    %p61 = scmp.eq.s32.totalorder %s18, 1
    %p62 = por %p60, %p61
    %p64 = scmp.ne.s32.totalorder %s49, %s63
    %p65 = scmp.eq.s32.totalorder %s18, 0
    %p66 = por %p64, %p65
    %s68 = sadd.s32 %s67, 1
    %p71 = scmp.eq.s32.totalorder %s12, 1
    %p72 = scmp.ne.s32.totalorder %s67, %s69
    %p73 = scmp.eq.s32.totalorder %s12, 0
    %p74 = por %p72, %p73
    %p75 = scmp.ne.s32.totalorder %s67, %s69
    %p76 = scmp.eq.s32.totalorder %s17, 1
    %p77 = por %p75, %p76
    %p78 = scmp.ne.s32.totalorder %s69, %s70
    %p79 = scmp.eq.s32.totalorder %s17, 0
    %p80 = por %p78, %p79
    %p81 = scmp.ne.s32.totalorder %s69, %s70
    %p82 = scmp.eq.s32.totalorder %s18, 1
    %p83 = por %p81, %p82
    %p85 = scmp.ne.s32.totalorder %s70, %s84
    %p86 = scmp.eq.s32.totalorder %s18, 0
    %p87 = por %p85, %p86
    %s89 = sadd.s32 %s88, 1
    %p92 = scmp.eq.s32.totalorder %s12, 1
    %p93 = scmp.ne.s32.totalorder %s88, %s90
    %p94 = scmp.eq.s32.totalorder %s12, 0
    %p95 = por %p93, %p94
    %p96 = scmp.ne.s32.totalorder %s88, %s90
    %p97 = scmp.eq.s32.totalorder %s17, 1
    %p98 = por %p96, %p97
    %p99 = scmp.ne.s32.totalorder %s90, %s91
    %p100 = scmp.eq.s32.totalorder %s17, 0
    %p101 = por %p99, %p100
    %p102 = scmp.ne.s32.totalorder %s90, %s91
    %p103 = scmp.eq.s32.totalorder %s18, 1
    %p104 = por %p102, %p103
    %p106 = scmp.ne.s32.totalorder %s91, %s105
    %p107 = scmp.eq.s32.totalorder %s18, 0
    %p108 = por %p106, %p107
    %s110 = sadd.s32 %s109, 1
    %p113 = scmp.eq.s32.totalorder %s12, 1
    %p114 = scmp.ne.s32.totalorder %s109, %s111
    %p115 = scmp.eq.s32.totalorder %s12, 0
    %p116 = por %p114, %p115
    %p117 = scmp.ne.s32.totalorder %s109, %s111
    %p118 = scmp.eq.s32.totalorder %s17, 1
    %p119 = por %p117, %p118
    %p120 = scmp.ne.s32.totalorder %s111, %s112
    %p121 = scmp.eq.s32.totalorder %s17, 0
    %p122 = por %p120, %p121
    %p123 = scmp.ne.s32.totalorder %s111, %s112
    %p124 = scmp.eq.s32.totalorder %s18, 1
    %p125 = por %p123, %p124
    %p127 = scmp.ne.s32.totalorder %s112, %s126
    %p128 = scmp.eq.s32.totalorder %s18, 0
    %p129 = por %p127, %p128
    %s131 = sadd.s32 %s130, 1
    %p134 = scmp.eq.s32.totalorder %s12, 1
    %p135 = scmp.ne.s32.totalorder %s130, %s132
    %p136 = scmp.eq.s32.totalorder %s12, 0
    %p137 = por %p135, %p136
    %p138 = scmp.ne.s32.totalorder %s130, %s132
    %p139 = scmp.eq.s32.totalorder %s17, 1
    %p140 = por %p138, %p139
    %p141 = scmp.ne.s32.totalorder %s132, %s133
    %p142 = scmp.eq.s32.totalorder %s17, 0
    %p143 = por %p141, %p142
    %p144 = scmp.ne.s32.totalorder %s132, %s133
    %p145 = scmp.eq.s32.totalorder %s18, 1
    %p146 = por %p144, %p145
    %p148 = scmp.ne.s32.totalorder %s133, %s147
    %p149 = scmp.eq.s32.totalorder %s18, 0
    %p150 = por %p148, %p149
    %s151 = ssub.s32 %s12, %s19
    %p152 = scmp.eq.s32.totalorder %s151, 0
    %s154 = sadd.s32 %s153, 1
    %s155 = scalar_select %p152, %s153, %s154
    %p158 = pneg %p152
    %p159 = scmp.eq.s32.totalorder %s12, 1
    %p160 = por %p158, %p159
    %p161 = scmp.ne.s32.totalorder %s153, %s156
    %p162 = scmp.eq.s32.totalorder %s12, 0
    %p163 = por %p161, %p162
    %p164 = scmp.ne.s32.totalorder %s153, %s156
    %p165 = scmp.eq.s32.totalorder %s17, 1
    %p166 = por %p164, %p165
    %p167 = scmp.ne.s32.totalorder %s156, %s157
    %p168 = scmp.eq.s32.totalorder %s17, 0
    %p169 = por %p167, %p168
    %p170 = scmp.ne.s32.totalorder %s156, %s157
    %p171 = scmp.eq.s32.totalorder %s18, 1
    %p172 = por %p170, %p171
    %p174 = scmp.ne.s32.totalorder %s157, %s173
    %p175 = scmp.eq.s32.totalorder %s18, 0
    %p176 = por %p174, %p175
    %p177 = scmp.le.s32.totalorder 1, %s12
    %p178 = scmp.lt.s32.totalorder %s12, 3
    %p179 = pnand %p177, %p178
    %p180 = pneg %p179
    // Predicated region
    $region9: #{conv_block_forward.1} parent=5 // pred_check
      _
    $region10: #{conv_block_forward.1} parent=5 // pred_check_branch
      %182 = sbr.rel (%p179) target = $region12
    $region11: #{conv_block_forward.1} parent=5 // pred_region
      %s183 = ssub.s32 %s12, 1
      // Predicated region
      $region13: #{conv_block_forward.1} parent=11 // pred_check
        %p184 = pneg %p59
      $region14: #{conv_block_forward.1} parent=11 // pred_check_branch
        %186 = sbr.rel (%p184) target = $region16
      $region15: #{conv_block_forward.1} parent=11 // pred_region
        _
      $region16: #{conv_block_forward.1} parent=11 // pred_fallthru
        _
      // Predicated region
      $region17: #{conv_block_forward.1} parent=11 // pred_check
        %p187 = pneg %p80
      $region18: #{conv_block_forward.1} parent=11 // pred_check_branch
        %189 = sbr.rel (%p187) target = $region20
      $region19: #{conv_block_forward.1} parent=11 // pred_region
        _
      $region20: #{conv_block_forward.1} parent=11 // pred_fallthru
        _
      // Predicated region
      $region21: #{conv_block_forward.1} parent=11 // pred_check
        %p190 = pneg %p101
      $region22: #{conv_block_forward.1} parent=11 // pred_check_branch
        %192 = sbr.rel (%p190) target = $region24
      $region23: #{conv_block_forward.1} parent=11 // pred_region
        _
      $region24: #{conv_block_forward.1} parent=11 // pred_fallthru
        _
      // Predicated region
      $region25: #{conv_block_forward.1} parent=11 // pred_check
        %p193 = pneg %p122
      $region26: #{conv_block_forward.1} parent=11 // pred_check_branch
        %195 = sbr.rel (%p193) target = $region28
      $region27: #{conv_block_forward.1} parent=11 // pred_region
        _
      $region28: #{conv_block_forward.1} parent=11 // pred_fallthru
        _
      // Predicated region
      $region29: #{conv_block_forward.1} parent=11 // pred_check
        %p196 = pneg %p143
      $region30: #{conv_block_forward.1} parent=11 // pred_check_branch
        %198 = sbr.rel (%p196) target = $region32
      $region31: #{conv_block_forward.1} parent=11 // pred_region
        _
      $region32: #{conv_block_forward.1} parent=11 // pred_fallthru
        _
    $region12: #{conv_block_forward.1} parent=5 // pred_fallthru
      _
    %p199 = scmp.lt.s32.totalorder %s12, 2
    // Predicated region
    $region33: #{conv_block_forward.1} parent=5 // pred_check
      %p200 = pneg %p199
    $region34: #{conv_block_forward.1} parent=5 // pred_check_branch
      %202 = sbr.rel (%p200) target = $region36
    $region35: #{conv_block_forward.1} parent=5 // pred_region
      // Predicated region
      $region37: #{conv_block_forward.1} parent=35 // pred_check
        %p203 = pneg %p32
      $region38: #{conv_block_forward.1} parent=35 // pred_check_branch
        %205 = sbr.rel (%p203) target = $region40
      $region39: #{conv_block_forward.1} parent=35 // pred_region
        %p206 = scmp.lt.s32.totalorder %s12, 1
        %s207 = scalar_select %p206, %s12, 1
        %s208 = smul.addr %s207, 2
        %s209 = smul.addr %s208, 4
        %s210 = scalar_lea.vmem %s0, %s209
      $region40: #{conv_block_forward.1} parent=35 // pred_fallthru
        _
    $region36: #{conv_block_forward.1} parent=5 // pred_fallthru
      _
    %p211 = scmp.le.s32.totalorder 1, %s12
    %p212 = scmp.lt.s32.totalorder %s12, 3
    %p213 = pnand %p211, %p212
    %p214 = pneg %p213
    // Predicated region
    $region41: #{conv_block_forward.1} parent=5 // pred_check
      _
    $region42: #{conv_block_forward.1} parent=5 // pred_check_branch
      %216 = sbr.rel (%p213) target = $region44
    $region43: #{conv_block_forward.1} parent=5 // pred_region
      %s217 = ssub.s32 %s12, 1
      %p218 = scmp.lt.s32.totalorder %s17, 1
      %s219 = scalar_select %p218, %s17, 1
      %s220 = smul.addr %s219, 2
      %s221 = smul.addr %s220, 4
      %s222 = scalar_lea.vmem %s0, %s221
      %p223 = pneg %p38
      %p224 = pneg %p35
      %p225 = pneg %p59
      %p226 = pneg %p56
      %p227 = pneg %p80
      %p228 = pneg %p77
      %p229 = pneg %p101
      %p230 = pneg %p98
      %p231 = pneg %p122
      %p232 = pneg %p119
      %p233 = pneg %p143
      %p234 = pneg %p140
      %p235 = pneg %p169
      %p236 = pneg %p166
      %p237 = scmp.lt.s32.totalorder %s17, 1
      %s238 = scalar_select %p237, %s17, 1
      %s239 = smul.addr %s238, 2
      %s240 = smul.addr %s239, 8
      %s241 = scalar_lea.vmem %s6, %s240
      %p242 = scmp.lt.s32.totalorder %s17, 1
      %s243 = scalar_select %p242, %s17, 1
      %s244 = smul.addr %s243, 2
      %s245 = smul.addr %s244, 4
      %s246 = scalar_lea.vmem %s0, %s245
      %p247 = scmp.lt.s32.totalorder %s17, 1
      %s248 = scalar_select %p247, %s17, 1
      %s249 = smul.addr %s248, 2
      %s250 = smul.addr %s249, 8
      %s251 = scalar_lea.vmem %s6, %s250
      %252 = vst [vmem:[#allocation2] sm:$0xf] 0.0
      %253 = vst [vmem:[#allocation2 + $0xc] sm:$0xf] 0.0
      %254 = vst [vmem:[#allocation3] sm:$0xff] 0.0
      %255 = vst [vmem:[#allocation3 + $0x18] sm:$0xff] 0.0
      %v256 = vld [vmem:[%s246] sm:$0xff]
      %257 = vst [vmem:[#allocation2 + $0x4] sm:$0xff] %v256
      %v258 = vld [vmem:[#allocation2] sm:$0xff]
      %v259 = vld [vmem:[#allocation2 + $0x8] sm:$0xf]
      %v260 = vld [vmem:[%s5] ss:$4 sm:$0x3]
      %v262 = vperm.slane %v260, 0
      %v263 = vperm.slane %v260, 1
      %v264 = vrot.slane %v263, 4
      %vm265 = vcmask 1043456
      %v266 = vsel %vm265, %v262, %v264
      %267 = vrot.lane.b32.xlu0 %v266, 111
      %v268 = vpop.permute.xlu0 %267
      %v269 = vrot.slane %v268, 4
      %vm270 = vcmask 908288
      %v271 = vsel %vm270, %v269, %v268
      %v274 = vmul.f32 %v258, %v271
      %v275 = vmul.f32 %v259, %v269
      %v276 = vld [vmem:[%s1] sm:$0xff]
      %s277 = scalar_lea.vmem %s1, 8
      %v278 = vld [vmem:[%s277] sm:$0xff]
      %281 = vst [vmem:[#allocation1] ss:$2 sm:$0xff] %v258
      %s282 = scalar_lea.vmem [#allocation1], 16
      %283 = vst [vmem:[%s282] ss:$2 sm:$0xff] %v259
      %v284 = vld.sshfl [vmem:[#allocation1] sm:$0xff pattern:$0x75316420]
      %v285 = vld.sshfl [vmem:[#allocation1 + $0x8] sm:$0xff pattern:$0x75316420]
      %v286 = vld.sshfl [vmem:[#allocation1 + $0x10] sm:$0xff pattern:$0x75316420]
      %287 = vrot.lane.b32.xlu0 %v284, 16
      %v288 = vpop.permute.xlu0 %287
      %289 = vrot.lane.b32.xlu0 %v285, 16
      %v290 = vpop.permute.xlu0 %289
      %291 = vrot.lane.b32.xlu0 %v286, 16
      %v292 = vpop.permute.xlu0 %291
      %vm293 = vcmask 130048
      %v294 = vsel %vm293, %v288, %v290
      %v295 = vsel %vm293, %v290, %v292
      %vm296 = vcmask 31744
      %v298 = vsel %vm296, %v278, 0
      %v300 = vsel %vm265, %v294, 0
      %v302 = vsel %vm265, %v295, 0
      %304 = vmatpush.msra.mxu0 0.0
      %305 = vmatpush.msra.mxu0 0.0
      %306 = vmatpush.msra.mxu0 0.0
      %307 = vmatpush.msra.mxu0 0.0
      %308 = vmatpush.msra.mxu0 0.0
      %309 = vmatpush.msra.mxu0 0.0
      %310 = vmatpush.msra.mxu0 0.0
      %311 = vmatpush.msra.mxu0 0.0
      %312 = vmatpush.msra.mxu0 0.0
      %313 = vmatpush.msra.mxu0 0.0
      %314 = vmatpush.msra.mxu0 0.0
      %315 = vmatpush.msra.mxu0 0.0
      %316 = vmatpush.msra.mxu0 0.0
      %317 = vmatpush.msra.mxu0 0.0
      %318 = vmatpush.msra.mxu0 0.0
      %319 = vmatpush.msra.mxu0 %v300
      %320 = vmatmul.f32.gmra.mxu0 %v298
      %v321 = vpop.f32.mrf.mxu0
      %v322 = vadd.f32 0.0, %v321
      %323 = vdwg.mxu0
      %324 = vmatpush.msra.mxu0 0.0
      %325 = vmatpush.msra.mxu0 0.0
      %326 = vmatpush.msra.mxu0 0.0
      %327 = vmatpush.msra.mxu0 0.0
      %328 = vmatpush.msra.mxu0 0.0
      %329 = vmatpush.msra.mxu0 0.0
      %330 = vmatpush.msra.mxu0 0.0
      %331 = vmatpush.msra.mxu0 0.0
      %332 = vmatpush.msra.mxu0 0.0
      %333 = vmatpush.msra.mxu0 0.0
      %334 = vmatpush.msra.mxu0 0.0
      %335 = vmatpush.msra.mxu0 0.0
      %336 = vmatpush.msra.mxu0 0.0
      %337 = vmatpush.msra.mxu0 0.0
      %338 = vmatpush.msra.mxu0 0.0
      %339 = vmatpush.msra.mxu0 %v302
      %340 = vmatmul.f32.gmra.mxu0 %v298
      %v341 = vpop.f32.mrf.mxu0
      %v342 = vadd.f32 0.0, %v341
      %343 = vdwg.mxu0
      %346 = vst [vmem:[#allocation1] ss:$2 sm:$0xff] %v274
      %s347 = scalar_lea.vmem [#allocation1], 16
      %348 = vst [vmem:[%s347] ss:$2 sm:$0xff] %v275
      %v349 = vld.sshfl [vmem:[#allocation1] sm:$0xff pattern:$0x75316420]
      %v350 = vld.sshfl [vmem:[#allocation1 + $0x8] sm:$0xff pattern:$0x75316420]
      %v351 = vld.sshfl [vmem:[#allocation1 + $0x10] sm:$0xff pattern:$0x75316420]
      %352 = vrot.lane.b32.xlu0 %v349, 17
      %v353 = vpop.permute.xlu0 %352
      %354 = vrot.lane.b32.xlu0 %v350, 17
      %v355 = vpop.permute.xlu0 %354
      %356 = vrot.lane.b32.xlu0 %v351, 17
      %v357 = vpop.permute.xlu0 %356
      %vm358 = vcmask 138240
      %v359 = vsel %vm358, %v353, %v355
      %v360 = vsel %vm358, %v355, %v357
      %v362 = vsel %vm296, %v276, 0
      %v364 = vsel %vm265, %v359, 0
      %v366 = vsel %vm265, %v360, 0
      %368 = vmatpush.msra.mxu0 0.0
      %369 = vmatpush.msra.mxu0 0.0
      %370 = vmatpush.msra.mxu0 0.0
      %371 = vmatpush.msra.mxu0 0.0
      %372 = vmatpush.msra.mxu0 0.0
      %373 = vmatpush.msra.mxu0 0.0
      %374 = vmatpush.msra.mxu0 0.0
      %375 = vmatpush.msra.mxu0 0.0
      %376 = vmatpush.msra.mxu0 0.0
      %377 = vmatpush.msra.mxu0 0.0
      %378 = vmatpush.msra.mxu0 0.0
      %379 = vmatpush.msra.mxu0 0.0
      %380 = vmatpush.msra.mxu0 0.0
      %381 = vmatpush.msra.mxu0 0.0
      %382 = vmatpush.msra.mxu0 0.0
      %383 = vmatpush.msra.mxu0 %v364
      %384 = vmatmul.f32.gmra.mxu0 %v362
      %v385 = vpop.f32.mrf.mxu0
      %v386 = vadd.f32 %v322, %v385
      %387 = vdwg.mxu0
      %388 = vmatpush.msra.mxu0 0.0
      %389 = vmatpush.msra.mxu0 0.0
      %390 = vmatpush.msra.mxu0 0.0
      %391 = vmatpush.msra.mxu0 0.0
      %392 = vmatpush.msra.mxu0 0.0
      %393 = vmatpush.msra.mxu0 0.0
      %394 = vmatpush.msra.mxu0 0.0
      %395 = vmatpush.msra.mxu0 0.0
      %396 = vmatpush.msra.mxu0 0.0
      %397 = vmatpush.msra.mxu0 0.0
      %398 = vmatpush.msra.mxu0 0.0
      %399 = vmatpush.msra.mxu0 0.0
      %400 = vmatpush.msra.mxu0 0.0
      %401 = vmatpush.msra.mxu0 0.0
      %402 = vmatpush.msra.mxu0 0.0
      %403 = vmatpush.msra.mxu0 %v366
      %404 = vmatmul.f32.gmra.mxu0 %v362
      %v405 = vpop.f32.mrf.mxu0
      %v406 = vadd.f32 %v342, %v405
      %407 = vdwg.mxu0
      %v408 = vld [vmem:[#allocation2] sm:$0xff]
      %v409 = vld [vmem:[#allocation2 + $0x8] sm:$0xf]
      %s410 = scalar_lea.vmem %s5, 2
      %v411 = vld [vmem:[%s410] ss:$4 sm:$0x3]
      %v413 = vperm.slane %v411, 0
      %v414 = vperm.slane %v411, 1
      %v415 = vrot.slane %v414, 4
      %v416 = vsel %vm265, %v413, %v415
      %417 = vrot.lane.b32.xlu0 %v416, 113
      %v418 = vpop.permute.xlu0 %417
      %v419 = vrot.slane %v418, 4
      %vm420 = vcmask 924672
      %v421 = vsel %vm420, %v419, %v418
      %v424 = vmul.f32 %v408, %v421
      %v425 = vmul.f32 %v409, %v419
      %s426 = scalar_lea.vmem %s1, 16
      %v427 = vld [vmem:[%s426] sm:$0xff]
      %430 = vst [vmem:[#allocation1] ss:$2 sm:$0xff] %v424
      %s431 = scalar_lea.vmem [#allocation1], 16
      %432 = vst [vmem:[%s431] ss:$2 sm:$0xff] %v425
      %v433 = vld.sshfl [vmem:[#allocation1] sm:$0xff pattern:$0x75316420]
      %v434 = vld.sshfl [vmem:[#allocation1 + $0x8] sm:$0xff pattern:$0x75316420]
      %v435 = vld.sshfl [vmem:[#allocation1 + $0x10] sm:$0xff pattern:$0x75316420]
      %436 = vrot.lane.b32.xlu0 %v433, 15
      %v437 = vpop.permute.xlu0 %436
      %438 = vrot.lane.b32.xlu0 %v434, 15
      %v439 = vpop.permute.xlu0 %438
      %440 = vrot.lane.b32.xlu0 %v435, 15
      %v441 = vpop.permute.xlu0 %440
      %vm442 = vcmask 121856
      %v443 = vsel %vm442, %v437, %v439
      %v444 = vsel %vm442, %v439, %v441
      %v446 = vsel %vm296, %v427, 0
      %v448 = vsel %vm265, %v443, 0
      %v450 = vsel %vm265, %v444, 0
      %452 = vmatpush.msra.mxu0 0.0
      %453 = vmatpush.msra.mxu0 0.0
      %454 = vmatpush.msra.mxu0 0.0
      %455 = vmatpush.msra.mxu0 0.0
      %456 = vmatpush.msra.mxu0 0.0
      %457 = vmatpush.msra.mxu0 0.0
      %458 = vmatpush.msra.mxu0 0.0
      %459 = vmatpush.msra.mxu0 0.0
      %460 = vmatpush.msra.mxu0 0.0
      %461 = vmatpush.msra.mxu0 0.0
      %462 = vmatpush.msra.mxu0 0.0
      %463 = vmatpush.msra.mxu0 0.0
      %464 = vmatpush.msra.mxu0 0.0
      %465 = vmatpush.msra.mxu0 0.0
      %466 = vmatpush.msra.mxu0 0.0
      %467 = vmatpush.msra.mxu0 %v448
      %468 = vmatmul.f32.gmra.mxu0 %v446
      %v469 = vpop.f32.mrf.mxu0
      %v470 = vadd.f32 0.0, %v469
      %471 = vdwg.mxu0
      %472 = vmatpush.msra.mxu0 0.0
      %473 = vmatpush.msra.mxu0 0.0
      %474 = vmatpush.msra.mxu0 0.0
      %475 = vmatpush.msra.mxu0 0.0
      %476 = vmatpush.msra.mxu0 0.0
      %477 = vmatpush.msra.mxu0 0.0
      %478 = vmatpush.msra.mxu0 0.0
      %479 = vmatpush.msra.mxu0 0.0
      %480 = vmatpush.msra.mxu0 0.0
      %481 = vmatpush.msra.mxu0 0.0
      %482 = vmatpush.msra.mxu0 0.0
      %483 = vmatpush.msra.mxu0 0.0
      %484 = vmatpush.msra.mxu0 0.0
      %485 = vmatpush.msra.mxu0 0.0
      %486 = vmatpush.msra.mxu0 0.0
      %487 = vmatpush.msra.mxu0 %v450
      %488 = vmatmul.f32.gmra.mxu0 %v446
      %v489 = vpop.f32.mrf.mxu0
      %v490 = vadd.f32 0.0, %v489
      %491 = vdwg.mxu0
      %v492 = vadd.f32 %v386, %v470
      %v493 = vadd.f32 %v406, %v490
      %v494 = vld [vmem:[#allocation2] sm:$0xff]
      %v495 = vld [vmem:[#allocation2 + $0x8] sm:$0xf]
      %496 = vrot.lane.b32.xlu0 %v266, 127
      %v497 = vpop.permute.xlu0 %496
      %v498 = vrot.slane %v497, 4
      %vm499 = vcmask 1039360
      %v500 = vsel %vm499, %v498, %v497
      %v503 = vmul.f32 %v494, %v500
      %v504 = vmul.f32 %v495, %v498
      %s505 = scalar_lea.vmem %s1, 24
      %v506 = vld [vmem:[%s505] sm:$0xff]
      %509 = vst [vmem:[#allocation1] ss:$2 sm:$0xff] %v503
      %s510 = scalar_lea.vmem [#allocation1], 16
      %511 = vst [vmem:[%s510] ss:$2 sm:$0xff] %v504
      %v512 = vld.sshfl [vmem:[#allocation1] sm:$0xff pattern:$0x75316420]
      %v513 = vld.sshfl [vmem:[#allocation1 + $0x8] sm:$0xff pattern:$0x75316420]
      %v514 = vld.sshfl [vmem:[#allocation1 + $0x10] sm:$0xff pattern:$0x75316420]
      %515 = vrot.lane.b32.xlu0 %v512, 1
      %v516 = vpop.permute.xlu0 %515
      %517 = vrot.lane.b32.xlu0 %v513, 1
      %v518 = vpop.permute.xlu0 %517
      %519 = vrot.lane.b32.xlu0 %v514, 1
      %v520 = vpop.permute.xlu0 %519
      %vm521 = vcmask 7168
      %v522 = vsel %vm521, %v516, %v518
      %v523 = vsel %vm521, %v518, %v520
      %v525 = vsel %vm296, %v506, 0
      %v527 = vsel %vm265, %v522, 0
      %v529 = vsel %vm265, %v523, 0
      %531 = vmatpush.msra.mxu0 0.0
      %532 = vmatpush.msra.mxu0 0.0
      %533 = vmatpush.msra.mxu0 0.0
      %534 = vmatpush.msra.mxu0 0.0
      %535 = vmatpush.msra.mxu0 0.0
      %536 = vmatpush.msra.mxu0 0.0
      %537 = vmatpush.msra.mxu0 0.0
      %538 = vmatpush.msra.mxu0 0.0
      %539 = vmatpush.msra.mxu0 0.0
      %540 = vmatpush.msra.mxu0 0.0
      %541 = vmatpush.msra.mxu0 0.0
      %542 = vmatpush.msra.mxu0 0.0
      %543 = vmatpush.msra.mxu0 0.0
      %544 = vmatpush.msra.mxu0 0.0
      %545 = vmatpush.msra.mxu0 0.0
      %546 = vmatpush.msra.mxu0 %v527
      %547 = vmatmul.f32.gmra.mxu0 %v525
      %v548 = vpop.f32.mrf.mxu0
      %v549 = vadd.f32 0.0, %v548
      %550 = vdwg.mxu0
      %551 = vmatpush.msra.mxu0 0.0
      %552 = vmatpush.msra.mxu0 0.0
      %553 = vmatpush.msra.mxu0 0.0
      %554 = vmatpush.msra.mxu0 0.0
      %555 = vmatpush.msra.mxu0 0.0
      %556 = vmatpush.msra.mxu0 0.0
      %557 = vmatpush.msra.mxu0 0.0
      %558 = vmatpush.msra.mxu0 0.0
      %559 = vmatpush.msra.mxu0 0.0
      %560 = vmatpush.msra.mxu0 0.0
      %561 = vmatpush.msra.mxu0 0.0
      %562 = vmatpush.msra.mxu0 0.0
      %563 = vmatpush.msra.mxu0 0.0
      %564 = vmatpush.msra.mxu0 0.0
      %565 = vmatpush.msra.mxu0 0.0
      %566 = vmatpush.msra.mxu0 %v529
      %567 = vmatmul.f32.gmra.mxu0 %v525
      %v568 = vpop.f32.mrf.mxu0
      %v569 = vadd.f32 0.0, %v568
      %570 = vdwg.mxu0
      %v571 = vadd.f32 %v492, %v549
      %v572 = vadd.f32 %v493, %v569
      %v573 = vld [vmem:[#allocation2 + $0x4] sm:$0xff]
      %s574 = scalar_lea.vmem %s1, 32
      %v575 = vld [vmem:[%s574] sm:$0xff]
      %577 = vst [vmem:[#allocation1] ss:$2 sm:$0xff] %v573
      %v578 = vld.sshfl [vmem:[#allocation1] sm:$0xff pattern:$0x75316420]
      %v579 = vld.sshfl [vmem:[#allocation1 + $0x8] sm:$0xff pattern:$0x75316420]
      %v581 = vsel %vm296, %v575, 0
      %v583 = vsel %vm265, %v578, 0
      %v585 = vsel %vm265, %v579, 0
      %587 = vmatpush.msra.mxu0 0.0
      %588 = vmatpush.msra.mxu0 0.0
      %589 = vmatpush.msra.mxu0 0.0
      %590 = vmatpush.msra.mxu0 0.0
      %591 = vmatpush.msra.mxu0 0.0
      %592 = vmatpush.msra.mxu0 0.0
      %593 = vmatpush.msra.mxu0 0.0
      %594 = vmatpush.msra.mxu0 0.0
      %595 = vmatpush.msra.mxu0 0.0
      %596 = vmatpush.msra.mxu0 0.0
      %597 = vmatpush.msra.mxu0 0.0
      %598 = vmatpush.msra.mxu0 0.0
      %599 = vmatpush.msra.mxu0 0.0
      %600 = vmatpush.msra.mxu0 0.0
      %601 = vmatpush.msra.mxu0 0.0
      %602 = vmatpush.msra.mxu0 %v583
      %603 = vmatmul.f32.gmra.mxu0 %v581
      %v604 = vpop.f32.mrf.mxu0
      %v605 = vadd.f32 0.0, %v604
      %606 = vdwg.mxu0
      %607 = vmatpush.msra.mxu0 0.0
      %608 = vmatpush.msra.mxu0 0.0
      %609 = vmatpush.msra.mxu0 0.0
      %610 = vmatpush.msra.mxu0 0.0
      %611 = vmatpush.msra.mxu0 0.0
      %612 = vmatpush.msra.mxu0 0.0
      %613 = vmatpush.msra.mxu0 0.0
      %614 = vmatpush.msra.mxu0 0.0
      %615 = vmatpush.msra.mxu0 0.0
      %616 = vmatpush.msra.mxu0 0.0
      %617 = vmatpush.msra.mxu0 0.0
      %618 = vmatpush.msra.mxu0 0.0
      %619 = vmatpush.msra.mxu0 0.0
      %620 = vmatpush.msra.mxu0 0.0
      %621 = vmatpush.msra.mxu0 0.0
      %622 = vmatpush.msra.mxu0 %v585
      %623 = vmatmul.f32.gmra.mxu0 %v581
      %v624 = vpop.f32.mrf.mxu0
      %v625 = vadd.f32 0.0, %v624
      %626 = vdwg.mxu0
      %v627 = vadd.f32 %v571, %v605
      %v628 = vadd.f32 %v572, %v625
      %v629 = vld [vmem:[#allocation2 + $0x4] sm:$0xff]
      %v630 = vld [vmem:[#allocation2 + $0xc] sm:$0xf]
      %631 = vrot.lane.b32.xlu0 %v416, 1
      %v632 = vpop.permute.xlu0 %631
      %v633 = vrot.slane %v632, 4
      %v634 = vsel %vm521, %v633, %v632
      %v637 = vmul.f32 %v629, %v634
      %v638 = vmul.f32 %v630, %v633
      %s639 = scalar_lea.vmem %s1, 40
      %v640 = vld [vmem:[%s639] sm:$0xff]
      %643 = vst [vmem:[#allocation1] ss:$2 sm:$0xff] %v637
      %s644 = scalar_lea.vmem [#allocation1], 16
      %645 = vst [vmem:[%s644] ss:$2 sm:$0xff] %v638
      %v646 = vld.sshfl [vmem:[#allocation1] sm:$0xff pattern:$0x75316420]
      %v647 = vld.sshfl [vmem:[#allocation1 + $0x8] sm:$0xff pattern:$0x75316420]
      %v648 = vld.sshfl [vmem:[#allocation1 + $0x10] sm:$0xff pattern:$0x75316420]
      %649 = vrot.lane.b32.xlu0 %v646, 127
      %v650 = vpop.permute.xlu0 %649
      %651 = vrot.lane.b32.xlu0 %v647, 127
      %v652 = vpop.permute.xlu0 %651
      %653 = vrot.lane.b32.xlu0 %v648, 127
      %v654 = vpop.permute.xlu0 %653
      %v655 = vsel %vm499, %v650, %v652
      %v656 = vsel %vm499, %v652, %v654
      %v658 = vsel %vm296, %v640, 0
      %v660 = vsel %vm265, %v655, 0
      %v662 = vsel %vm265, %v656, 0
      %664 = vmatpush.msra.mxu0 0.0
      %665 = vmatpush.msra.mxu0 0.0
      %666 = vmatpush.msra.mxu0 0.0
      %667 = vmatpush.msra.mxu0 0.0
      %668 = vmatpush.msra.mxu0 0.0
      %669 = vmatpush.msra.mxu0 0.0
      %670 = vmatpush.msra.mxu0 0.0
      %671 = vmatpush.msra.mxu0 0.0
      %672 = vmatpush.msra.mxu0 0.0
      %673 = vmatpush.msra.mxu0 0.0
      %674 = vmatpush.msra.mxu0 0.0
      %675 = vmatpush.msra.mxu0 0.0
      %676 = vmatpush.msra.mxu0 0.0
      %677 = vmatpush.msra.mxu0 0.0
      %678 = vmatpush.msra.mxu0 0.0
      %679 = vmatpush.msra.mxu0 %v660
      %680 = vmatmul.f32.gmra.mxu0 %v658
      %v681 = vpop.f32.mrf.mxu0
      %v682 = vadd.f32 0.0, %v681
      %683 = vdwg.mxu0
      %684 = vmatpush.msra.mxu0 0.0
      %685 = vmatpush.msra.mxu0 0.0
      %686 = vmatpush.msra.mxu0 0.0
      %687 = vmatpush.msra.mxu0 0.0
      %688 = vmatpush.msra.mxu0 0.0
      %689 = vmatpush.msra.mxu0 0.0
      %690 = vmatpush.msra.mxu0 0.0
      %691 = vmatpush.msra.mxu0 0.0
      %692 = vmatpush.msra.mxu0 0.0
      %693 = vmatpush.msra.mxu0 0.0
      %694 = vmatpush.msra.mxu0 0.0
      %695 = vmatpush.msra.mxu0 0.0
      %696 = vmatpush.msra.mxu0 0.0
      %697 = vmatpush.msra.mxu0 0.0
      %698 = vmatpush.msra.mxu0 0.0
      %699 = vmatpush.msra.mxu0 %v662
      %700 = vmatmul.f32.gmra.mxu0 %v658
      %v701 = vpop.f32.mrf.mxu0
      %v702 = vadd.f32 0.0, %v701
      %703 = vdwg.mxu0
      %v704 = vadd.f32 %v627, %v682
      %v705 = vadd.f32 %v628, %v702
      %v706 = vld [vmem:[#allocation2 + $0x4] sm:$0xff]
      %v707 = vld [vmem:[#allocation2 + $0xc] sm:$0xf]
      %708 = vrot.lane.b32.xlu0 %v266, 15
      %v709 = vpop.permute.xlu0 %708
      %v710 = vrot.slane %v709, 4
      %v711 = vsel %vm442, %v710, %v709
      %v714 = vmul.f32 %v706, %v711
      %v715 = vmul.f32 %v707, %v710
      %s716 = scalar_lea.vmem %s1, 48
      %v717 = vld [vmem:[%s716] sm:$0xff]
      %720 = vst [vmem:[#allocation1] ss:$2 sm:$0xff] %v714
      %s721 = scalar_lea.vmem [#allocation1], 16
      %722 = vst [vmem:[%s721] ss:$2 sm:$0xff] %v715
      %v723 = vld.sshfl [vmem:[#allocation1] sm:$0xff pattern:$0x75316420]
      %v724 = vld.sshfl [vmem:[#allocation1 + $0x8] sm:$0xff pattern:$0x75316420]
      %v725 = vld.sshfl [vmem:[#allocation1 + $0x10] sm:$0xff pattern:$0x75316420]
      %726 = vrot.lane.b32.xlu0 %v723, 113
      %v727 = vpop.permute.xlu0 %726
      %728 = vrot.lane.b32.xlu0 %v724, 113
      %v729 = vpop.permute.xlu0 %728
      %730 = vrot.lane.b32.xlu0 %v725, 113
      %v731 = vpop.permute.xlu0 %730
      %v732 = vsel %vm420, %v727, %v729
      %v733 = vsel %vm420, %v729, %v731
      %v735 = vsel %vm296, %v717, 0
      %v737 = vsel %vm265, %v732, 0
      %v739 = vsel %vm265, %v733, 0
      %741 = vmatpush.msra.mxu0 0.0
      %742 = vmatpush.msra.mxu0 0.0
      %743 = vmatpush.msra.mxu0 0.0
      %744 = vmatpush.msra.mxu0 0.0
      %745 = vmatpush.msra.mxu0 0.0
      %746 = vmatpush.msra.mxu0 0.0
      %747 = vmatpush.msra.mxu0 0.0
      %748 = vmatpush.msra.mxu0 0.0
      %749 = vmatpush.msra.mxu0 0.0
      %750 = vmatpush.msra.mxu0 0.0
      %751 = vmatpush.msra.mxu0 0.0
      %752 = vmatpush.msra.mxu0 0.0
      %753 = vmatpush.msra.mxu0 0.0
      %754 = vmatpush.msra.mxu0 0.0
      %755 = vmatpush.msra.mxu0 0.0
      %756 = vmatpush.msra.mxu0 %v737
      %757 = vmatmul.f32.gmra.mxu0 %v735
      %v758 = vpop.f32.mrf.mxu0
      %v759 = vadd.f32 0.0, %v758
      %760 = vdwg.mxu0
      %761 = vmatpush.msra.mxu0 0.0
      %762 = vmatpush.msra.mxu0 0.0
      %763 = vmatpush.msra.mxu0 0.0
      %764 = vmatpush.msra.mxu0 0.0
      %765 = vmatpush.msra.mxu0 0.0
      %766 = vmatpush.msra.mxu0 0.0
      %767 = vmatpush.msra.mxu0 0.0
      %768 = vmatpush.msra.mxu0 0.0
      %769 = vmatpush.msra.mxu0 0.0
      %770 = vmatpush.msra.mxu0 0.0
      %771 = vmatpush.msra.mxu0 0.0
      %772 = vmatpush.msra.mxu0 0.0
      %773 = vmatpush.msra.mxu0 0.0
      %774 = vmatpush.msra.mxu0 0.0
      %775 = vmatpush.msra.mxu0 0.0
      %776 = vmatpush.msra.mxu0 %v739
      %777 = vmatmul.f32.gmra.mxu0 %v735
      %v778 = vpop.f32.mrf.mxu0
      %v779 = vadd.f32 0.0, %v778
      %780 = vdwg.mxu0
      %v781 = vadd.f32 %v704, %v759
      %v782 = vadd.f32 %v705, %v779
      %v783 = vld [vmem:[#allocation2 + $0x4] sm:$0xff]
      %v784 = vld [vmem:[#allocation2 + $0xc] sm:$0xf]
      %s785 = scalar_lea.vmem %s1, 56
      %v786 = vld [vmem:[%s785] sm:$0xff]
      %789 = vst [vmem:[#allocation1] ss:$2 sm:$0xff] %v783
      %s790 = scalar_lea.vmem [#allocation1], 16
      %791 = vst [vmem:[%s790] ss:$2 sm:$0xff] %v784
      %v792 = vld.sshfl [vmem:[#allocation1] sm:$0xff pattern:$0x75316420]
      %v793 = vld.sshfl [vmem:[#allocation1 + $0x8] sm:$0xff pattern:$0x75316420]
      %v794 = vld.sshfl [vmem:[#allocation1 + $0x10] sm:$0xff pattern:$0x75316420]
      %795 = vrot.lane.b32.xlu0 %v792, 112
      %v796 = vpop.permute.xlu0 %795
      %797 = vrot.lane.b32.xlu0 %v793, 112
      %v798 = vpop.permute.xlu0 %797
      %799 = vrot.lane.b32.xlu0 %v794, 112
      %v800 = vpop.permute.xlu0 %799
      %vm801 = vcmask 916480
      %v802 = vsel %vm801, %v796, %v798
      %v803 = vsel %vm801, %v798, %v800
      %v805 = vsel %vm296, %v786, 0
      %v807 = vsel %vm265, %v802, 0
      %v809 = vsel %vm265, %v803, 0
      %811 = vmatpush.msra.mxu0 0.0
      %812 = vmatpush.msra.mxu0 0.0
      %813 = vmatpush.msra.mxu0 0.0
      %814 = vmatpush.msra.mxu0 0.0
      %815 = vmatpush.msra.mxu0 0.0
      %816 = vmatpush.msra.mxu0 0.0
      %817 = vmatpush.msra.mxu0 0.0
      %818 = vmatpush.msra.mxu0 0.0
      %819 = vmatpush.msra.mxu0 0.0
      %820 = vmatpush.msra.mxu0 0.0
      %821 = vmatpush.msra.mxu0 0.0
      %822 = vmatpush.msra.mxu0 0.0
      %823 = vmatpush.msra.mxu0 0.0
      %824 = vmatpush.msra.mxu0 0.0
      %825 = vmatpush.msra.mxu0 0.0
      %826 = vmatpush.msra.mxu0 %v807
      %827 = vmatmul.f32.gmra.mxu0 %v805
      %v828 = vpop.f32.mrf.mxu0
      %v829 = vadd.f32 0.0, %v828
      %830 = vdwg.mxu0
      %831 = vmatpush.msra.mxu0 0.0
      %832 = vmatpush.msra.mxu0 0.0
      %833 = vmatpush.msra.mxu0 0.0
      %834 = vmatpush.msra.mxu0 0.0
      %835 = vmatpush.msra.mxu0 0.0
      %836 = vmatpush.msra.mxu0 0.0
      %837 = vmatpush.msra.mxu0 0.0
      %838 = vmatpush.msra.mxu0 0.0
      %839 = vmatpush.msra.mxu0 0.0
      %840 = vmatpush.msra.mxu0 0.0
      %841 = vmatpush.msra.mxu0 0.0
      %842 = vmatpush.msra.mxu0 0.0
      %843 = vmatpush.msra.mxu0 0.0
      %844 = vmatpush.msra.mxu0 0.0
      %845 = vmatpush.msra.mxu0 0.0
      %846 = vmatpush.msra.mxu0 %v809
      %847 = vmatmul.f32.gmra.mxu0 %v805
      %v848 = vpop.f32.mrf.mxu0
      %v849 = vadd.f32 0.0, %v848
      %850 = vdwg.mxu0
      %v851 = vadd.f32 %v781, %v829
      %v852 = vadd.f32 %v782, %v849
      %v853 = vld [vmem:[#allocation2 + $0x4] sm:$0xff]
      %v854 = vld [vmem:[#allocation2 + $0xc] sm:$0xf]
      %855 = vrot.lane.b32.xlu0 %v416, 17
      %v856 = vpop.permute.xlu0 %855
      %v857 = vrot.slane %v856, 4
      %v858 = vsel %vm358, %v857, %v856
      %v861 = vmul.f32 %v853, %v858
      %v862 = vmul.f32 %v854, %v857
      %s863 = scalar_lea.vmem %s1, 64
      %v864 = vld [vmem:[%s863] sm:$0xff]
      %867 = vst [vmem:[#allocation1] ss:$2 sm:$0xff] %v861
      %s868 = scalar_lea.vmem [#allocation1], 16
      %869 = vst [vmem:[%s868] ss:$2 sm:$0xff] %v862
      %v870 = vld.sshfl [vmem:[#allocation1] sm:$0xff pattern:$0x75316420]
      %v871 = vld.sshfl [vmem:[#allocation1 + $0x8] sm:$0xff pattern:$0x75316420]
      %v872 = vld.sshfl [vmem:[#allocation1 + $0x10] sm:$0xff pattern:$0x75316420]
      %873 = vrot.lane.b32.xlu0 %v870, 111
      %v874 = vpop.permute.xlu0 %873
      %875 = vrot.lane.b32.xlu0 %v871, 111
      %v876 = vpop.permute.xlu0 %875
      %877 = vrot.lane.b32.xlu0 %v872, 111
      %v878 = vpop.permute.xlu0 %877
      %v879 = vsel %vm270, %v874, %v876
      %v880 = vsel %vm270, %v876, %v878
      %v882 = vsel %vm296, %v864, 0
      %v884 = vsel %vm265, %v879, 0
      %v886 = vsel %vm265, %v880, 0
      %888 = vmatpush.msra.mxu0 0.0
      %889 = vmatpush.msra.mxu0 0.0
      %890 = vmatpush.msra.mxu0 0.0
      %891 = vmatpush.msra.mxu0 0.0
      %892 = vmatpush.msra.mxu0 0.0
      %893 = vmatpush.msra.mxu0 0.0
      %894 = vmatpush.msra.mxu0 0.0
      %895 = vmatpush.msra.mxu0 0.0
      %896 = vmatpush.msra.mxu0 0.0
      %897 = vmatpush.msra.mxu0 0.0
      %898 = vmatpush.msra.mxu0 0.0
      %899 = vmatpush.msra.mxu0 0.0
      %900 = vmatpush.msra.mxu0 0.0
      %901 = vmatpush.msra.mxu0 0.0
      %902 = vmatpush.msra.mxu0 0.0
      %903 = vmatpush.msra.mxu0 %v884
      %904 = vmatmul.f32.gmra.mxu0 %v882
      %v905 = vpop.f32.mrf.mxu0
      %v906 = vadd.f32 0.0, %v905
      %907 = vdwg.mxu0
      %908 = vmatpush.msra.mxu0 0.0
      %909 = vmatpush.msra.mxu0 0.0
      %910 = vmatpush.msra.mxu0 0.0
      %911 = vmatpush.msra.mxu0 0.0
      %912 = vmatpush.msra.mxu0 0.0
      %913 = vmatpush.msra.mxu0 0.0
      %914 = vmatpush.msra.mxu0 0.0
      %915 = vmatpush.msra.mxu0 0.0
      %916 = vmatpush.msra.mxu0 0.0
      %917 = vmatpush.msra.mxu0 0.0
      %918 = vmatpush.msra.mxu0 0.0
      %919 = vmatpush.msra.mxu0 0.0
      %920 = vmatpush.msra.mxu0 0.0
      %921 = vmatpush.msra.mxu0 0.0
      %922 = vmatpush.msra.mxu0 0.0
      %923 = vmatpush.msra.mxu0 %v886
      %924 = vmatmul.f32.gmra.mxu0 %v882
      %v925 = vpop.f32.mrf.mxu0
      %v926 = vadd.f32 0.0, %v925
      %927 = vdwg.mxu0
      %v928 = vadd.f32 %v851, %v906
      %v929 = vadd.f32 %v852, %v926
      %v930 = vld [vmem:[%s2] sm:$0xff]
      %932 = vset.pattern.permute.xlu0 0
      %933 = vperm.xlu0 %932, %v930
      %v934 = vpop.permute.xlu0 %933
      %v936 = vadd.f32 %v928, %v934
      %v937 = vadd.f32 %v929, %v934
      %938 = vst [vmem:[#allocation3 + $0x8] sm:$0xff] %v936
      %939 = vst [vmem:[#allocation3 + $0x10] sm:$0xff] %v937
      %v940 = vld [vmem:[#allocation3] sm:$0xff]
      %v941 = vld [vmem:[#allocation3 + $0x8] sm:$0xff]
      %v942 = vld [vmem:[#allocation3 + $0x10] sm:$0xff]
      %v943 = vld [vmem:[%s5] ss:$4 sm:$0x3]
      %v945 = vperm.slane %v943, 0
      %v946 = vperm.slane %v943, 1
      %947 = vrot.lane.b32.xlu0 %v945, 111
      %v948 = vpop.permute.xlu0 %947
      %949 = vrot.lane.b32.xlu0 %v946, 111
      %v950 = vpop.permute.xlu0 %949
      %v951 = vsel %vm270, %v948, %v950
      %v955 = vmul.f32 %v940, %v948
      %v956 = vmul.f32 %v941, %v951
      %v957 = vmul.f32 %v942, %v950
      %v958 = vld [vmem:[%s3] sm:$0xff]
      %s959 = scalar_lea.vmem %s3, 8
      %v960 = vld [vmem:[%s959] sm:$0xff]
      %964 = vrot.lane.b32.xlu0 %v940, 16
      %v965 = vpop.permute.xlu0 %964
      %966 = vrot.lane.b32.xlu0 %v941, 16
      %v967 = vpop.permute.xlu0 %966
      %968 = vrot.lane.b32.xlu0 %v942, 16
      %v969 = vpop.permute.xlu0 %968
      %v970 = vsel %vm293, %v965, %v967
      %v971 = vsel %vm293, %v967, %v969
      %vm974 = vcmask 64512
      %v976 = vsel %vm974, %v960, 0
      %978 = vmatpush.msra.mxu0 0.0
      %979 = vmatpush.msra.mxu0 0.0
      %980 = vmatpush.msra.mxu0 0.0
      %981 = vmatpush.msra.mxu0 0.0
      %982 = vmatpush.msra.mxu0 0.0
      %983 = vmatpush.msra.mxu0 0.0
      %984 = vmatpush.msra.mxu0 0.0
      %985 = vmatpush.msra.mxu0 0.0
      %986 = vmatpush.msra.mxu0 0.0
      %987 = vmatpush.msra.mxu0 0.0
      %988 = vmatpush.msra.mxu0 0.0
      %989 = vmatpush.msra.mxu0 0.0
      %990 = vmatpush.msra.mxu0 0.0
      %991 = vmatpush.msra.mxu0 0.0
      %992 = vmatpush.msra.mxu0 0.0
      %993 = vmatpush.msra.mxu0 %v970
      %994 = vmatmul.f32.gmra.mxu0 %v976
      %v995 = vpop.f32.mrf.mxu0
      %v996 = vadd.f32 0.0, %v995
      %997 = vdwg.mxu0
      %998 = vmatpush.msra.mxu0 0.0
      %999 = vmatpush.msra.mxu0 0.0
      %1000 = vmatpush.msra.mxu0 0.0
      %1001 = vmatpush.msra.mxu0 0.0
      %1002 = vmatpush.msra.mxu0 0.0
      %1003 = vmatpush.msra.mxu0 0.0
      %1004 = vmatpush.msra.mxu0 0.0
      %1005 = vmatpush.msra.mxu0 0.0
      %1006 = vmatpush.msra.mxu0 0.0
      %1007 = vmatpush.msra.mxu0 0.0
      %1008 = vmatpush.msra.mxu0 0.0
      %1009 = vmatpush.msra.mxu0 0.0
      %1010 = vmatpush.msra.mxu0 0.0
      %1011 = vmatpush.msra.mxu0 0.0
      %1012 = vmatpush.msra.mxu0 0.0
      %1013 = vmatpush.msra.mxu0 %v971
      %1014 = vmatmul.f32.gmra.mxu0 %v976
      %v1015 = vpop.f32.mrf.mxu0
      %v1016 = vadd.f32 0.0, %v1015
      %1017 = vdwg.mxu0
      %1021 = vrot.lane.b32.xlu0 %v955, 17
      %v1022 = vpop.permute.xlu0 %1021
      %1023 = vrot.lane.b32.xlu0 %v956, 17
      %v1024 = vpop.permute.xlu0 %1023
      %1025 = vrot.lane.b32.xlu0 %v957, 17
      %v1026 = vpop.permute.xlu0 %1025
      %v1027 = vsel %vm358, %v1022, %v1024
      %v1028 = vsel %vm358, %v1024, %v1026
      %v1032 = vsel %vm974, %v958, 0
      %1034 = vmatpush.msra.mxu0 0.0
      %1035 = vmatpush.msra.mxu0 0.0
      %1036 = vmatpush.msra.mxu0 0.0
      %1037 = vmatpush.msra.mxu0 0.0
      %1038 = vmatpush.msra.mxu0 0.0
      %1039 = vmatpush.msra.mxu0 0.0
      %1040 = vmatpush.msra.mxu0 0.0
      %1041 = vmatpush.msra.mxu0 0.0
      %1042 = vmatpush.msra.mxu0 0.0
      %1043 = vmatpush.msra.mxu0 0.0
      %1044 = vmatpush.msra.mxu0 0.0
      %1045 = vmatpush.msra.mxu0 0.0
      %1046 = vmatpush.msra.mxu0 0.0
      %1047 = vmatpush.msra.mxu0 0.0
      %1048 = vmatpush.msra.mxu0 0.0
      %1049 = vmatpush.msra.mxu0 %v1027
      %1050 = vmatmul.f32.gmra.mxu0 %v1032
      %v1051 = vpop.f32.mrf.mxu0
      %v1052 = vadd.f32 %v996, %v1051
      %1053 = vdwg.mxu0
      %1054 = vmatpush.msra.mxu0 0.0
      %1055 = vmatpush.msra.mxu0 0.0
      %1056 = vmatpush.msra.mxu0 0.0
      %1057 = vmatpush.msra.mxu0 0.0
      %1058 = vmatpush.msra.mxu0 0.0
      %1059 = vmatpush.msra.mxu0 0.0
      %1060 = vmatpush.msra.mxu0 0.0
      %1061 = vmatpush.msra.mxu0 0.0
      %1062 = vmatpush.msra.mxu0 0.0
      %1063 = vmatpush.msra.mxu0 0.0
      %1064 = vmatpush.msra.mxu0 0.0
      %1065 = vmatpush.msra.mxu0 0.0
      %1066 = vmatpush.msra.mxu0 0.0
      %1067 = vmatpush.msra.mxu0 0.0
      %1068 = vmatpush.msra.mxu0 0.0
      %1069 = vmatpush.msra.mxu0 %v1028
      %1070 = vmatmul.f32.gmra.mxu0 %v1032
      %v1071 = vpop.f32.mrf.mxu0
      %v1072 = vadd.f32 %v1016, %v1071
      %1073 = vdwg.mxu0
      %v1074 = vld [vmem:[%s410] ss:$4 sm:$0x3]
      %v1076 = vperm.slane %v1074, 0
      %v1077 = vperm.slane %v1074, 1
      %1078 = vrot.lane.b32.xlu0 %v1076, 113
      %v1079 = vpop.permute.xlu0 %1078
      %1080 = vrot.lane.b32.xlu0 %v1077, 113
      %v1081 = vpop.permute.xlu0 %1080
      %v1082 = vsel %vm420, %v1079, %v1081
      %v1086 = vmul.f32 %v940, %v1079
      %v1087 = vmul.f32 %v941, %v1082
      %v1088 = vmul.f32 %v942, %v1081
      %s1089 = scalar_lea.vmem %s3, 16
      %v1090 = vld [vmem:[%s1089] sm:$0xff]
      %1094 = vrot.lane.b32.xlu0 %v1086, 15
      %v1095 = vpop.permute.xlu0 %1094
      %1096 = vrot.lane.b32.xlu0 %v1087, 15
      %v1097 = vpop.permute.xlu0 %1096
      %1098 = vrot.lane.b32.xlu0 %v1088, 15
      %v1099 = vpop.permute.xlu0 %1098
      %v1100 = vsel %vm442, %v1095, %v1097
      %v1101 = vsel %vm442, %v1097, %v1099
      %v1105 = vsel %vm974, %v1090, 0
      %1107 = vmatpush.msra.mxu0 0.0
      %1108 = vmatpush.msra.mxu0 0.0
      %1109 = vmatpush.msra.mxu0 0.0
      %1110 = vmatpush.msra.mxu0 0.0
      %1111 = vmatpush.msra.mxu0 0.0
      %1112 = vmatpush.msra.mxu0 0.0
      %1113 = vmatpush.msra.mxu0 0.0
      %1114 = vmatpush.msra.mxu0 0.0
      %1115 = vmatpush.msra.mxu0 0.0
      %1116 = vmatpush.msra.mxu0 0.0
      %1117 = vmatpush.msra.mxu0 0.0
      %1118 = vmatpush.msra.mxu0 0.0
      %1119 = vmatpush.msra.mxu0 0.0
      %1120 = vmatpush.msra.mxu0 0.0
      %1121 = vmatpush.msra.mxu0 0.0
      %1122 = vmatpush.msra.mxu0 %v1100
      %1123 = vmatmul.f32.gmra.mxu0 %v1105
      %v1124 = vpop.f32.mrf.mxu0
      %v1125 = vadd.f32 0.0, %v1124
      %1126 = vdwg.mxu0
      %1127 = vmatpush.msra.mxu0 0.0
      %1128 = vmatpush.msra.mxu0 0.0
      %1129 = vmatpush.msra.mxu0 0.0
      %1130 = vmatpush.msra.mxu0 0.0
      %1131 = vmatpush.msra.mxu0 0.0
      %1132 = vmatpush.msra.mxu0 0.0
      %1133 = vmatpush.msra.mxu0 0.0
      %1134 = vmatpush.msra.mxu0 0.0
      %1135 = vmatpush.msra.mxu0 0.0
      %1136 = vmatpush.msra.mxu0 0.0
      %1137 = vmatpush.msra.mxu0 0.0
      %1138 = vmatpush.msra.mxu0 0.0
      %1139 = vmatpush.msra.mxu0 0.0
      %1140 = vmatpush.msra.mxu0 0.0
      %1141 = vmatpush.msra.mxu0 0.0
      %1142 = vmatpush.msra.mxu0 %v1101
      %1143 = vmatmul.f32.gmra.mxu0 %v1105
      %v1144 = vpop.f32.mrf.mxu0
      %v1145 = vadd.f32 0.0, %v1144
      %1146 = vdwg.mxu0
      %v1147 = vadd.f32 %v1052, %v1125
      %v1148 = vadd.f32 %v1072, %v1145
      %1149 = vrot.lane.b32.xlu0 %v945, 127
      %v1150 = vpop.permute.xlu0 %1149
      %1151 = vrot.lane.b32.xlu0 %v946, 127
      %v1152 = vpop.permute.xlu0 %1151
      %v1153 = vsel %vm499, %v1150, %v1152
      %v1157 = vmul.f32 %v940, %v1150
      %v1158 = vmul.f32 %v941, %v1153
      %v1159 = vmul.f32 %v942, %v1152
      %s1160 = scalar_lea.vmem %s3, 24
      %v1161 = vld [vmem:[%s1160] sm:$0xff]
      %1165 = vrot.lane.b32.xlu0 %v1157, 1
      %v1166 = vpop.permute.xlu0 %1165
      %1167 = vrot.lane.b32.xlu0 %v1158, 1
      %v1168 = vpop.permute.xlu0 %1167
      %1169 = vrot.lane.b32.xlu0 %v1159, 1
      %v1170 = vpop.permute.xlu0 %1169
      %v1171 = vsel %vm521, %v1166, %v1168
      %v1172 = vsel %vm521, %v1168, %v1170
      %v1176 = vsel %vm974, %v1161, 0
      %1178 = vmatpush.msra.mxu0 0.0
      %1179 = vmatpush.msra.mxu0 0.0
      %1180 = vmatpush.msra.mxu0 0.0
      %1181 = vmatpush.msra.mxu0 0.0
      %1182 = vmatpush.msra.mxu0 0.0
      %1183 = vmatpush.msra.mxu0 0.0
      %1184 = vmatpush.msra.mxu0 0.0
      %1185 = vmatpush.msra.mxu0 0.0
      %1186 = vmatpush.msra.mxu0 0.0
      %1187 = vmatpush.msra.mxu0 0.0
      %1188 = vmatpush.msra.mxu0 0.0
      %1189 = vmatpush.msra.mxu0 0.0
      %1190 = vmatpush.msra.mxu0 0.0
      %1191 = vmatpush.msra.mxu0 0.0
      %1192 = vmatpush.msra.mxu0 0.0
      %1193 = vmatpush.msra.mxu0 %v1171
      %1194 = vmatmul.f32.gmra.mxu0 %v1176
      %v1195 = vpop.f32.mrf.mxu0
      %v1196 = vadd.f32 0.0, %v1195
      %1197 = vdwg.mxu0
      %1198 = vmatpush.msra.mxu0 0.0
      %1199 = vmatpush.msra.mxu0 0.0
      %1200 = vmatpush.msra.mxu0 0.0
      %1201 = vmatpush.msra.mxu0 0.0
      %1202 = vmatpush.msra.mxu0 0.0
      %1203 = vmatpush.msra.mxu0 0.0
      %1204 = vmatpush.msra.mxu0 0.0
      %1205 = vmatpush.msra.mxu0 0.0
      %1206 = vmatpush.msra.mxu0 0.0
      %1207 = vmatpush.msra.mxu0 0.0
      %1208 = vmatpush.msra.mxu0 0.0
      %1209 = vmatpush.msra.mxu0 0.0
      %1210 = vmatpush.msra.mxu0 0.0
      %1211 = vmatpush.msra.mxu0 0.0
      %1212 = vmatpush.msra.mxu0 0.0
      %1213 = vmatpush.msra.mxu0 %v1172
      %1214 = vmatmul.f32.gmra.mxu0 %v1176
      %v1215 = vpop.f32.mrf.mxu0
      %v1216 = vadd.f32 0.0, %v1215
      %1217 = vdwg.mxu0
      %v1218 = vadd.f32 %v1147, %v1196
      %v1219 = vadd.f32 %v1148, %v1216
      %s1220 = scalar_lea.vmem %s3, 32
      %v1221 = vld [vmem:[%s1220] sm:$0xff]
      %v1223 = vsel %vm974, %v1221, 0
      %1225 = vmatpush.msra.mxu0 0.0
      %1226 = vmatpush.msra.mxu0 0.0
      %1227 = vmatpush.msra.mxu0 0.0
      %1228 = vmatpush.msra.mxu0 0.0
      %1229 = vmatpush.msra.mxu0 0.0
      %1230 = vmatpush.msra.mxu0 0.0
      %1231 = vmatpush.msra.mxu0 0.0
      %1232 = vmatpush.msra.mxu0 0.0
      %1233 = vmatpush.msra.mxu0 0.0
      %1234 = vmatpush.msra.mxu0 0.0
      %1235 = vmatpush.msra.mxu0 0.0
      %1236 = vmatpush.msra.mxu0 0.0
      %1237 = vmatpush.msra.mxu0 0.0
      %1238 = vmatpush.msra.mxu0 0.0
      %1239 = vmatpush.msra.mxu0 0.0
      %1240 = vmatpush.msra.mxu0 %v941
      %1241 = vmatmul.f32.gmra.mxu0 %v1223
      %v1242 = vpop.f32.mrf.mxu0
      %v1243 = vadd.f32 0.0, %v1242
      %1244 = vdwg.mxu0
      %1245 = vmatpush.msra.mxu0 0.0
      %1246 = vmatpush.msra.mxu0 0.0
      %1247 = vmatpush.msra.mxu0 0.0
      %1248 = vmatpush.msra.mxu0 0.0
      %1249 = vmatpush.msra.mxu0 0.0
      %1250 = vmatpush.msra.mxu0 0.0
      %1251 = vmatpush.msra.mxu0 0.0
      %1252 = vmatpush.msra.mxu0 0.0
      %1253 = vmatpush.msra.mxu0 0.0
      %1254 = vmatpush.msra.mxu0 0.0
      %1255 = vmatpush.msra.mxu0 0.0
      %1256 = vmatpush.msra.mxu0 0.0
      %1257 = vmatpush.msra.mxu0 0.0
      %1258 = vmatpush.msra.mxu0 0.0
      %1259 = vmatpush.msra.mxu0 0.0
      %1260 = vmatpush.msra.mxu0 %v942
      %1261 = vmatmul.f32.gmra.mxu0 %v1223
      %v1262 = vpop.f32.mrf.mxu0
      %v1263 = vadd.f32 0.0, %v1262
      %1264 = vdwg.mxu0
      %v1265 = vadd.f32 %v1218, %v1243
      %v1266 = vadd.f32 %v1219, %v1263
      %v1267 = vld [vmem:[#allocation3 + $0x8] sm:$0xff]
      %v1268 = vld [vmem:[#allocation3 + $0x10] sm:$0xff]
      %v1269 = vld [vmem:[#allocation3 + $0x18] sm:$0xff]
      %1270 = vrot.lane.b32.xlu0 %v1076, 1
      %v1271 = vpop.permute.xlu0 %1270
      %1272 = vrot.lane.b32.xlu0 %v1077, 1
      %v1273 = vpop.permute.xlu0 %1272
      %v1274 = vsel %vm521, %v1271, %v1273
      %v1278 = vmul.f32 %v1267, %v1271
      %v1279 = vmul.f32 %v1268, %v1274
      %v1280 = vmul.f32 %v1269, %v1273
      %s1281 = scalar_lea.vmem %s3, 40
      %v1282 = vld [vmem:[%s1281] sm:$0xff]
      %1286 = vrot.lane.b32.xlu0 %v1278, 127
      %v1287 = vpop.permute.xlu0 %1286
      %1288 = vrot.lane.b32.xlu0 %v1279, 127
      %v1289 = vpop.permute.xlu0 %1288
      %1290 = vrot.lane.b32.xlu0 %v1280, 127
      %v1291 = vpop.permute.xlu0 %1290
      %v1292 = vsel %vm499, %v1287, %v1289
      %v1293 = vsel %vm499, %v1289, %v1291
      %v1297 = vsel %vm974, %v1282, 0
      %1299 = vmatpush.msra.mxu0 0.0
      %1300 = vmatpush.msra.mxu0 0.0
      %1301 = vmatpush.msra.mxu0 0.0
      %1302 = vmatpush.msra.mxu0 0.0
      %1303 = vmatpush.msra.mxu0 0.0
      %1304 = vmatpush.msra.mxu0 0.0
      %1305 = vmatpush.msra.mxu0 0.0
      %1306 = vmatpush.msra.mxu0 0.0
      %1307 = vmatpush.msra.mxu0 0.0
      %1308 = vmatpush.msra.mxu0 0.0
      %1309 = vmatpush.msra.mxu0 0.0
      %1310 = vmatpush.msra.mxu0 0.0
      %1311 = vmatpush.msra.mxu0 0.0
      %1312 = vmatpush.msra.mxu0 0.0
      %1313 = vmatpush.msra.mxu0 0.0
      %1314 = vmatpush.msra.mxu0 %v1292
      %1315 = vmatmul.f32.gmra.mxu0 %v1297
      %v1316 = vpop.f32.mrf.mxu0
      %v1317 = vadd.f32 0.0, %v1316
      %1318 = vdwg.mxu0
      %1319 = vmatpush.msra.mxu0 0.0
      %1320 = vmatpush.msra.mxu0 0.0
      %1321 = vmatpush.msra.mxu0 0.0
      %1322 = vmatpush.msra.mxu0 0.0
      %1323 = vmatpush.msra.mxu0 0.0
      %1324 = vmatpush.msra.mxu0 0.0
      %1325 = vmatpush.msra.mxu0 0.0
      %1326 = vmatpush.msra.mxu0 0.0
      %1327 = vmatpush.msra.mxu0 0.0
      %1328 = vmatpush.msra.mxu0 0.0
      %1329 = vmatpush.msra.mxu0 0.0
      %1330 = vmatpush.msra.mxu0 0.0
      %1331 = vmatpush.msra.mxu0 0.0
      %1332 = vmatpush.msra.mxu0 0.0
      %1333 = vmatpush.msra.mxu0 0.0
      %1334 = vmatpush.msra.mxu0 %v1293
      %1335 = vmatmul.f32.gmra.mxu0 %v1297
      %v1336 = vpop.f32.mrf.mxu0
      %v1337 = vadd.f32 0.0, %v1336
      %1338 = vdwg.mxu0
      %v1339 = vadd.f32 %v1265, %v1317
      %v1340 = vadd.f32 %v1266, %v1337
      %1341 = vrot.lane.b32.xlu0 %v945, 15
      %v1342 = vpop.permute.xlu0 %1341
      %1343 = vrot.lane.b32.xlu0 %v946, 15
      %v1344 = vpop.permute.xlu0 %1343
      %v1345 = vsel %vm442, %v1342, %v1344
      %v1349 = vmul.f32 %v1267, %v1342
      %v1350 = vmul.f32 %v1268, %v1345
      %v1351 = vmul.f32 %v1269, %v1344
      %s1352 = scalar_lea.vmem %s3, 48
      %v1353 = vld [vmem:[%s1352] sm:$0xff]
      %1357 = vrot.lane.b32.xlu0 %v1349, 113
      %v1358 = vpop.permute.xlu0 %1357
      %1359 = vrot.lane.b32.xlu0 %v1350, 113
      %v1360 = vpop.permute.xlu0 %1359
      %1361 = vrot.lane.b32.xlu0 %v1351, 113
      %v1362 = vpop.permute.xlu0 %1361
      %v1363 = vsel %vm420, %v1358, %v1360
      %v1364 = vsel %vm420, %v1360, %v1362
      %v1368 = vsel %vm974, %v1353, 0
      %1370 = vmatpush.msra.mxu0 0.0
      %1371 = vmatpush.msra.mxu0 0.0
      %1372 = vmatpush.msra.mxu0 0.0
      %1373 = vmatpush.msra.mxu0 0.0
      %1374 = vmatpush.msra.mxu0 0.0
      %1375 = vmatpush.msra.mxu0 0.0
      %1376 = vmatpush.msra.mxu0 0.0
      %1377 = vmatpush.msra.mxu0 0.0
      %1378 = vmatpush.msra.mxu0 0.0
      %1379 = vmatpush.msra.mxu0 0.0
      %1380 = vmatpush.msra.mxu0 0.0
      %1381 = vmatpush.msra.mxu0 0.0
      %1382 = vmatpush.msra.mxu0 0.0
      %1383 = vmatpush.msra.mxu0 0.0
      %1384 = vmatpush.msra.mxu0 0.0
      %1385 = vmatpush.msra.mxu0 %v1363
      %1386 = vmatmul.f32.gmra.mxu0 %v1368
      %v1387 = vpop.f32.mrf.mxu0
      %v1388 = vadd.f32 0.0, %v1387
      %1389 = vdwg.mxu0
      %1390 = vmatpush.msra.mxu0 0.0
      %1391 = vmatpush.msra.mxu0 0.0
      %1392 = vmatpush.msra.mxu0 0.0
      %1393 = vmatpush.msra.mxu0 0.0
      %1394 = vmatpush.msra.mxu0 0.0
      %1395 = vmatpush.msra.mxu0 0.0
      %1396 = vmatpush.msra.mxu0 0.0
      %1397 = vmatpush.msra.mxu0 0.0
      %1398 = vmatpush.msra.mxu0 0.0
      %1399 = vmatpush.msra.mxu0 0.0
      %1400 = vmatpush.msra.mxu0 0.0
      %1401 = vmatpush.msra.mxu0 0.0
      %1402 = vmatpush.msra.mxu0 0.0
      %1403 = vmatpush.msra.mxu0 0.0
      %1404 = vmatpush.msra.mxu0 0.0
      %1405 = vmatpush.msra.mxu0 %v1364
      %1406 = vmatmul.f32.gmra.mxu0 %v1368
      %v1407 = vpop.f32.mrf.mxu0
      %v1408 = vadd.f32 0.0, %v1407
      %1409 = vdwg.mxu0
      %v1410 = vadd.f32 %v1339, %v1388
      %v1411 = vadd.f32 %v1340, %v1408
      %s1412 = scalar_lea.vmem %s3, 56
      %v1413 = vld [vmem:[%s1412] sm:$0xff]
      %1417 = vrot.lane.b32.xlu0 %v1267, 112
      %v1418 = vpop.permute.xlu0 %1417
      %1419 = vrot.lane.b32.xlu0 %v1268, 112
      %v1420 = vpop.permute.xlu0 %1419
      %1421 = vrot.lane.b32.xlu0 %v1269, 112
      %v1422 = vpop.permute.xlu0 %1421
      %v1423 = vsel %vm801, %v1418, %v1420
      %v1424 = vsel %vm801, %v1420, %v1422
      %v1428 = vsel %vm974, %v1413, 0
      %1430 = vmatpush.msra.mxu0 0.0
      %1431 = vmatpush.msra.mxu0 0.0
      %1432 = vmatpush.msra.mxu0 0.0
      %1433 = vmatpush.msra.mxu0 0.0
      %1434 = vmatpush.msra.mxu0 0.0
      %1435 = vmatpush.msra.mxu0 0.0
      %1436 = vmatpush.msra.mxu0 0.0
      %1437 = vmatpush.msra.mxu0 0.0
      %1438 = vmatpush.msra.mxu0 0.0
      %1439 = vmatpush.msra.mxu0 0.0
      %1440 = vmatpush.msra.mxu0 0.0
      %1441 = vmatpush.msra.mxu0 0.0
      %1442 = vmatpush.msra.mxu0 0.0
      %1443 = vmatpush.msra.mxu0 0.0
      %1444 = vmatpush.msra.mxu0 0.0
      %1445 = vmatpush.msra.mxu0 %v1423
      %1446 = vmatmul.f32.gmra.mxu0 %v1428
      %v1447 = vpop.f32.mrf.mxu0
      %v1448 = vadd.f32 0.0, %v1447
      %1449 = vdwg.mxu0
      %1450 = vmatpush.msra.mxu0 0.0
      %1451 = vmatpush.msra.mxu0 0.0
      %1452 = vmatpush.msra.mxu0 0.0
      %1453 = vmatpush.msra.mxu0 0.0
      %1454 = vmatpush.msra.mxu0 0.0
      %1455 = vmatpush.msra.mxu0 0.0
      %1456 = vmatpush.msra.mxu0 0.0
      %1457 = vmatpush.msra.mxu0 0.0
      %1458 = vmatpush.msra.mxu0 0.0
      %1459 = vmatpush.msra.mxu0 0.0
      %1460 = vmatpush.msra.mxu0 0.0
      %1461 = vmatpush.msra.mxu0 0.0
      %1462 = vmatpush.msra.mxu0 0.0
      %1463 = vmatpush.msra.mxu0 0.0
      %1464 = vmatpush.msra.mxu0 0.0
      %1465 = vmatpush.msra.mxu0 %v1424
      %1466 = vmatmul.f32.gmra.mxu0 %v1428
      %v1467 = vpop.f32.mrf.mxu0
      %v1468 = vadd.f32 0.0, %v1467
      %1469 = vdwg.mxu0
      %v1470 = vadd.f32 %v1410, %v1448
      %v1471 = vadd.f32 %v1411, %v1468
      %1472 = vrot.lane.b32.xlu0 %v1076, 17
      %v1473 = vpop.permute.xlu0 %1472
      %1474 = vrot.lane.b32.xlu0 %v1077, 17
      %v1475 = vpop.permute.xlu0 %1474
      %v1476 = vsel %vm358, %v1473, %v1475
      %v1480 = vmul.f32 %v1267, %v1473
      %v1481 = vmul.f32 %v1268, %v1476
      %v1482 = vmul.f32 %v1269, %v1475
      %s1483 = scalar_lea.vmem %s3, 64
      %v1484 = vld [vmem:[%s1483] sm:$0xff]
      %1488 = vrot.lane.b32.xlu0 %v1480, 111
      %v1489 = vpop.permute.xlu0 %1488
      %1490 = vrot.lane.b32.xlu0 %v1481, 111
      %v1491 = vpop.permute.xlu0 %1490
      %1492 = vrot.lane.b32.xlu0 %v1482, 111
      %v1493 = vpop.permute.xlu0 %1492
      %v1494 = vsel %vm270, %v1489, %v1491
      %v1495 = vsel %vm270, %v1491, %v1493
      %v1499 = vsel %vm974, %v1484, 0
      %1501 = vmatpush.msra.mxu0 0.0
      %1502 = vmatpush.msra.mxu0 0.0
      %1503 = vmatpush.msra.mxu0 0.0
      %1504 = vmatpush.msra.mxu0 0.0
      %1505 = vmatpush.msra.mxu0 0.0
      %1506 = vmatpush.msra.mxu0 0.0
      %1507 = vmatpush.msra.mxu0 0.0
      %1508 = vmatpush.msra.mxu0 0.0
      %1509 = vmatpush.msra.mxu0 0.0
      %1510 = vmatpush.msra.mxu0 0.0
      %1511 = vmatpush.msra.mxu0 0.0
      %1512 = vmatpush.msra.mxu0 0.0
      %1513 = vmatpush.msra.mxu0 0.0
      %1514 = vmatpush.msra.mxu0 0.0
      %1515 = vmatpush.msra.mxu0 0.0
      %1516 = vmatpush.msra.mxu0 %v1494
      %1517 = vmatmul.f32.gmra.mxu0 %v1499
      %v1518 = vpop.f32.mrf.mxu0
      %v1519 = vadd.f32 0.0, %v1518
      %1520 = vdwg.mxu0
      %1521 = vmatpush.msra.mxu0 0.0
      %1522 = vmatpush.msra.mxu0 0.0
      %1523 = vmatpush.msra.mxu0 0.0
      %1524 = vmatpush.msra.mxu0 0.0
      %1525 = vmatpush.msra.mxu0 0.0
      %1526 = vmatpush.msra.mxu0 0.0
      %1527 = vmatpush.msra.mxu0 0.0
      %1528 = vmatpush.msra.mxu0 0.0
      %1529 = vmatpush.msra.mxu0 0.0
      %1530 = vmatpush.msra.mxu0 0.0
      %1531 = vmatpush.msra.mxu0 0.0
      %1532 = vmatpush.msra.mxu0 0.0
      %1533 = vmatpush.msra.mxu0 0.0
      %1534 = vmatpush.msra.mxu0 0.0
      %1535 = vmatpush.msra.mxu0 0.0
      %1536 = vmatpush.msra.mxu0 %v1495
      %1537 = vmatmul.f32.gmra.mxu0 %v1499
      %v1538 = vpop.f32.mrf.mxu0
      %v1539 = vadd.f32 0.0, %v1538
      %1540 = vdwg.mxu0
      %v1541 = vadd.f32 %v1470, %v1519
      %v1542 = vadd.f32 %v1471, %v1539
      %v1543 = vld [vmem:[%s4] sm:$0xff]
      %1545 = vset.pattern.permute.xlu0 0
      %1546 = vperm.xlu0 %1545, %v1543
      %v1547 = vpop.permute.xlu0 %1546
      %v1549 = vadd.f32 %v1541, %v1547
      %v1550 = vadd.f32 %v1542, %v1547
      %v1551 = vmax.f32 %v1549, 0.0
      %v1552 = vmax.f32 %v1550, 0.0
      %1553 = vst [vmem:[%s251] sm:$0xff] %v1551
      %1554 = vst [vmem:[%s251 + $0x8] sm:$0xff] %v1552
      %p1555 = scmp.lt.s32.totalorder %s17, 1
      %s1556 = scalar_select %p1555, %s17, 1
      %s1557 = smul.addr %s1556, 2
      %s1558 = smul.addr %s1557, 8
      %s1559 = scalar_lea.vmem %s6, %s1558
      // Predicated region
      $region45: #{conv_block_forward.1} parent=43 // pred_check
        %p1560 = pneg %p166
      $region46: #{conv_block_forward.1} parent=43 // pred_check_branch
        %1562 = sbr.rel (%p1560) target = $region48
      $region47: #{conv_block_forward.1} parent=43 // pred_region
        _
      $region48: #{conv_block_forward.1} parent=43 // pred_fallthru
        _
    $region44: #{conv_block_forward.1} parent=5 // pred_fallthru
      _
    %p1563 = scmp.le.s32.totalorder 2, %s12
    // Predicated region
    $region49: #{conv_block_forward.1} parent=5 // pred_check
      %p1564 = pneg %p1563
    $region50: #{conv_block_forward.1} parent=5 // pred_check_branch
      %1566 = sbr.rel (%p1564) target = $region52
    $region51: #{conv_block_forward.1} parent=5 // pred_region
      %s1567 = ssub.s32 %s12, 2
      // Predicated region
      $region53: #{conv_block_forward.1} parent=51 // pred_check
        %p1568 = pneg %p172
      $region54: #{conv_block_forward.1} parent=51 // pred_check_branch
        %1570 = sbr.rel (%p1568) target = $region56
      $region55: #{conv_block_forward.1} parent=51 // pred_region
        %p1571 = scmp.lt.s32.totalorder %s18, 1
        %s1572 = scalar_select %p1571, %s18, 1
        %s1573 = smul.addr %s1572, 2
        %s1574 = smul.addr %s1573, 8
        %s1575 = scalar_lea.vmem %s6, %s1574
      $region56: #{conv_block_forward.1} parent=51 // pred_fallthru
        _
    $region52: #{conv_block_forward.1} parent=5 // pred_fallthru
      _
  $region6: #{conv_block_forward.1} parent=0 // loop_footer
    %s16 = sadd.s32 1, %s12
  $region7: #{conv_block_forward.1} parent=0 // loop_footer_branch
    %11 = sbr.rel target = $region3
  $region8: #{conv_block_forward.1} parent=0 // loop_exit
    _

</llo_original>
